<compile_context>
chip_gen: v7x
topology: tpu7x:2x2x1
jax: 0.10.0
libtpu: 0.0.40
codegen_flags: <defaults>
</compile_context>

<pallas_src>
import functools

import jax
import jax.numpy as jnp
from jax.experimental import pallas as pl
from jax.experimental.pallas import tpu as pltpu

LANE = 128  # lane-padded feature width for inputs, hidden dims and fc output


def _round_up(x, m):
    return ((x + m - 1) // m) * m


# ------------------------------- Pallas kernel ------------------------------ #

def _fused_graphsage_kernel(x0_hbm, a_ref, dinv_ref, wl_ref, wr_ref, b_ref,
                            p_ref, wfc_ref, bfc_ref, out_ref,
                            acc_ref, h_ref, pool_ref, x0_sem, *, n_pad):
    """Fused GraphSAGE forward: all layers + global_mean_pool + fc.

    grid = (L, num_dst_tiles, num_src_tiles)

    per-step refs:
      x0_hbm   (n_pad, DP) bf16  input features, raw HBM ref (copied once into h_ref)
      a_ref    (TM, TK)    bf16  0/1 edge-count tile A_cnt[i, k]
      dinv_ref (TM, 1)     f32   1 / in_degree for the dst rows of tile i
      wl_ref   (DP, HP)    bf16  lin_l weight of layer l (zero padded)
      wr_ref   (DP, HP)    bf16  lin_r weight of layer l (zero padded)
      b_ref    (1, HP)     f32   lin_l bias of layer l (zero padded)
      p_ref    (GP, TM)    bf16  mean-pool matrix tile P[:, i]
      wfc_ref  (HP, OP)    f32   fc weight (zero padded)
      bfc_ref  (1, OP)     f32   fc bias (zero padded)
      out_ref  (GP, OP)    f32   final output (written once, on the last grid step)
    scratch:
      acc_ref  (TM, DP)      f32   A_cnt @ X accumulator for the current (layer, dst tile)
      h_ref    (2*n_pad, HP) bf16  ping-pong node features, resident across layers
      pool_ref (GP, HP)      f32   P @ H accumulator for the last layer
      x0_sem   DMA semaphore for the one-time x0 HBM -> VMEM copy
    """
    l = pl.program_id(0)
    i = pl.program_id(1)
    k = pl.program_id(2)
    nl = pl.num_programs(0)
    ni = pl.num_programs(1)
    nk = pl.num_programs(2)
    tm, tk = a_ref.shape

    # ping-pong bases inside the resident feature scratch
    read_base = ((l + 1) % 2) * n_pad     # previous layer's output (x0 for layer 0)
    write_base = (l % 2) * n_pad          # this layer's output

    # ---- one-time copy: x0 -> "layer -1 output" half of H (slot used by layer 0) ----
    @pl.when((l == 0) & (i == 0) & (k == 0))
    def _load_x0():
        cp = pltpu.make_async_copy(x0_hbm, h_ref.at[pl.ds(n_pad, n_pad), :], x0_sem)
        cp.start()
        cp.wait()

    @pl.when(k == 0)
    def _init_acc():
        acc_ref[...] = jnp.zeros_like(acc_ref)

    # ---- aggregation: acc += A_cnt[i, k] @ H_src[k]  (bf16 MXU, f32 accumulate) ----
    src_off = pl.multiple_of(read_base + k * tk, LANE)
    h_src = h_ref[pl.ds(src_off, tk), :]
    acc_ref[...] += jnp.dot(a_ref[...], h_src, preferred_element_type=jnp.float32)

    # ---- finalize dst tile: h = ReLU((acc * 1/deg) @ W_l + x_dst @ W_r + b) ----
    @pl.when(k == nk - 1)
    def _finalize_tile():
        dst_off = pl.multiple_of(read_base + i * tm, LANE)
        h_dst = h_ref[pl.ds(dst_off, tm), :]
        # exact mean: counts accumulated in f32, scaled by f32 1/deg, then cast to bf16
        agg = (acc_ref[...] * dinv_ref[...]).astype(jnp.bfloat16)
        # two MXU dots into one f32 result (no lane-axis concat temp)
        h = jnp.dot(agg, wl_ref[...], preferred_element_type=jnp.float32)
        h = h + jnp.dot(h_dst, wr_ref[...], preferred_element_type=jnp.float32)
        h = jnp.maximum(h + b_ref[...], 0.0)                       # bias + ReLU
        h_bf = h.astype(jnp.bfloat16)

        out_off = pl.multiple_of(write_base + i * tm, LANE)
        h_ref[pl.ds(out_off, tm), :] = h_bf

        # ---- last layer: fused global_mean_pool + fc ----
        @pl.when(l == nl - 1)
        def _pool():
            @pl.when(i == 0)
            def _init_pool():
                pool_ref[...] = jnp.zeros_like(pool_ref)

            # bf16 operands, f32 accumulation; consumes the same rounded h as stored
            pool_ref[...] += jnp.dot(p_ref[...], h_bf,
                                     preferred_element_type=jnp.float32)

            @pl.when(i == ni - 1)
            def _fc():
                out = jnp.dot(pool_ref[...], wfc_ref[...],
                              preferred_element_type=jnp.float32)
                out_ref[...] = out + bfc_ref[...]


# ------------------------------ kernel wrapper ------------------------------ #

def graph_sage_forward(x0, a_cnt, d_inv, w_l, w_r, b, p, w_fc, b_fc, *,
                       tm=256, tk=256):
    """x0: [N,128] bf16, a_cnt: [N,N] bf16 (0/1 counts), d_inv: [N,1] f32,
    w_l/w_r: [L,128,128] bf16, b: [L,1,128] f32, p: [G,N] bf16,
    w_fc: [128,128] f32, b_fc: [1,128] f32  ->  [G,128] f32."""
    n_pad = a_cnt.shape[0]
    num_layers = w_l.shape[0]
    dp = x0.shape[1]
    hp = w_l.shape[2]
    gp, op = p.shape[0], w_fc.shape[1]
    assert dp == hp and w_r.shape == w_l.shape
    assert n_pad % tm == 0 and n_pad % tk == 0
    assert tm % LANE == 0 and tk % LANE == 0   # keeps the multiple_of hints valid

    grid = (num_layers, n_pad // tm, n_pad // tk)
    kernel = functools.partial(_fused_graphsage_kernel, n_pad=n_pad)

    flops = (num_layers * (2 * n_pad * n_pad * dp + 2 * 2 * n_pad * dp * hp)
             + 2 * gp * n_pad * hp + 2 * gp * hp * op)
    bytes_accessed = (num_layers * n_pad * n_pad * 2          # A counts re-streamed per layer
                      + n_pad * dp * 2                        # x0 copied once
                      + num_layers * n_pad * 4                # 1/deg
                      + num_layers * (2 * dp * hp * 2 + hp * 4)
                      + num_layers * gp * n_pad * 2           # P tiles
                      + hp * op * 4 + op * 4 + gp * op * 4)

    # VMEM budget: double-buffered input tiles + resident scratch, with headroom.
    # Capped at 48 MiB so the same config is safe on v7x (64 MiB/TC); raise toward
    # ~100 MiB on v5e/v6e (128 MiB VMEM) for larger graphs / bigger tiles.
    vmem_need = (2 * tm * tk * 2 + 2 * tm * 4 + 2 * gp * tm * 2        # A, 1/deg, P
                 + 4 * dp * hp * 2 + 2 * hp * 4                        # W_l, W_r, bias
                 + 2 * hp * op * 4 + 2 * op * 4 + 2 * gp * op * 4      # fc + out
                 + tm * dp * 4 + 2 * n_pad * hp * 2 + gp * hp * 4)     # scratch
    vmem_limit = min(max(2 * vmem_need + (4 << 20), 16 << 20), 48 << 20)

    return pl.pallas_call(
        kernel,
        out_shape=jax.ShapeDtypeStruct((gp, op), jnp.float32),
        grid_spec=pltpu.PrefetchScalarGridSpec(
            num_scalar_prefetch=0,
            grid=grid,
            in_specs=[
                pl.BlockSpec(memory_space=pl.ANY),                        # x0 (HBM, copied once)
                pl.BlockSpec((tm, tk), lambda l, i, k: (i, k)),           # A counts tile
                pl.BlockSpec((tm, 1), lambda l, i, k: (i, 0)),            # 1/deg rows
                pl.BlockSpec((None, dp, hp), lambda l, i, k: (l, 0, 0)),  # W_l[l]
                pl.BlockSpec((None, dp, hp), lambda l, i, k: (l, 0, 0)),  # W_r[l]
                pl.BlockSpec((None, 1, hp), lambda l, i, k: (l, 0, 0)),   # bias[l]
                pl.BlockSpec((gp, tm), lambda l, i, k: (0, i)),           # P tile
                pl.BlockSpec((hp, op), lambda l, i, k: (0, 0)),           # W_fc
                pl.BlockSpec((1, op), lambda l, i, k: (0, 0)),            # b_fc
            ],
            out_specs=pl.BlockSpec((gp, op), lambda l, i, k: (0, 0)),
            scratch_shapes=[
                pltpu.VMEM((tm, dp), jnp.float32),           # aggregation accumulator
                pltpu.VMEM((2 * n_pad, hp), jnp.bfloat16),   # resident ping-pong H
                pltpu.VMEM((gp, hp), jnp.float32),           # pooled accumulator
                pltpu.SemaphoreType.DMA,                     # one-time x0 copy
            ],
        ),
        compiler_params=pltpu.CompilerParams(
            # Cross-tile deps via the resident H scratch (layer l+1 and the pooled
            # reduction need every dst tile of layer l) -> all axes 'arbitrary'.
            # TODO(synk): on v7x, split the dst-tile axis across the 2 TensorCores.
            dimension_semantics=("arbitrary", "arbitrary", "arbitrary"),
            vmem_limit_bytes=vmem_limit,
        ),
        cost_estimate=pl.CostEstimate(flops=flops, transcendentals=0,
                                      bytes_accessed=bytes_accessed),
    )(x0, a_cnt, d_inv, w_l, w_r, b, p, w_fc, b_fc)


# --------------------------- operand preparation ---------------------------- #

def build_adjacency_counts(edge_index, n_pad, dtype=jnp.bfloat16):
    """Dense 0/1 edge counts A_cnt[dst, src] (exact in bf16) + f32 1/in_degree per dst.

    TODO(synk): replace dense O(N^2) counts with CSR / block-sparse tiles driven by
    scalar prefetch; use int8/int4 counts on v5e/v6e, fp8 on v7x, for bigger graphs.
    """
    src, dst = edge_index[0], edge_index[1]
    counts = jnp.zeros((n_pad, n_pad), jnp.float32).at[dst, src].add(1.0)
    deg = counts.sum(axis=1, keepdims=True)
    inv_deg = jnp.where(deg > 0, 1.0 / jnp.maximum(deg, 1.0), 0.0)
    return counts.astype(dtype), inv_deg.astype(jnp.float32)


def build_mean_pool(batch, num_nodes, g_pad, n_pad, dtype=jnp.bfloat16):
    """Dense P[g, n] = 1/|graph g| for n in graph g, zero-padded to (g_pad, n_pad)."""
    onehot = (batch[None, :] == jnp.arange(g_pad)[:, None]).astype(jnp.float32)
    sizes = onehot.sum(axis=1, keepdims=True)
    p = onehot / jnp.maximum(sizes, 1.0)
    return jnp.pad(p, ((0, 0), (0, n_pad - num_nodes))).astype(dtype)


def init_params(key, input_dim, hidden_dims, output_dim):
    """Logical (unpadded) parameters; weights stored [Din, H] for X @ W layout."""
    params = []
    dims = [input_dim] + list(hidden_dims)
    for i in range(len(hidden_dims)):
        key, k1, k2, k3 = jax.random.split(key, 4)
        din, dh = dims[i], dims[i + 1]
        w_l = jax.random.normal(k1, (din, dh), jnp.float32) * 0.1
        w_r = jax.random.normal(k2, (din, dh), jnp.float32) * 0.1
        b = jax.random.normal(k3, (1, dh), jnp.float32) * 0.01
        params.append((w_l, w_r, b))
    key, kf = jax.random.split(key)
    dh, do = hidden_dims[-1], output_dim
    limit = (6.0 / (dh + do)) ** 0.5                    # xavier_uniform fc weight
    w_fc = jax.random.uniform(kf, (dh, do), jnp.float32, -limit, limit)
    b_fc = jnp.zeros((1, do), jnp.float32)              # zero fc bias
    return params, (w_fc, b_fc)


def pack_params(layer_params, fc_params, input_dim, hidden_dims, lane=LANE):
    """Zero-pad everything to 128 lanes and stack per-layer weights."""
    assert max([input_dim] + list(hidden_dims)) <= lane
    dims_in = [input_dim] + list(hidden_dims[:-1])
    wl_s, wr_s, b_s = [], [], []
    for (w_l, w_r, b), din in zip(layer_params, dims_in):
        dh = w_l.shape[1]
        wl_s.append(jnp.zeros((lane, lane), jnp.float32).at[:din, :dh].set(w_l))
        wr_s.append(jnp.zeros((lane, lane), jnp.float32).at[:din, :dh].set(w_r))
        b_s.append(jnp.zeros((1, lane), jnp.float32).at[0, :dh].set(b.reshape(-1)))
    w_fc, b_fc = fc_params
    dh, do = w_fc.shape
    assert do <= lane
    w_fc_pad = jnp.zeros((lane, lane), jnp.float32).at[:dh, :do].set(w_fc)
    b_fc_pad = jnp.zeros((1, lane), jnp.float32).at[0, :do].set(b_fc.reshape(-1))
    return (jnp.stack(wl_s).astype(jnp.bfloat16),   # [L, 128, 128] bf16  lin_l
            jnp.stack(wr_s).astype(jnp.bfloat16),   # [L, 128, 128] bf16  lin_r
            jnp.stack(b_s),                          # [L, 1, 128]   f32
            w_fc_pad, b_fc_pad)                      # [128,128], [1,128] f32


# ----------------------- pure-JAX reference (f32) --------------------------- #

def reference(x, edge_index, batch, params, num_graphs):
    layer_params, (w_fc, b_fc) = params
    n = x.shape[0]
    src, dst = edge_index[0], edge_index[1]
    counts = jnp.zeros((n, n), jnp.float32).at[dst, src].add(1.0)
    deg = counts.sum(axis=1, keepdims=True)
    a = jnp.where(deg > 0, counts / jnp.maximum(deg, 1.0), 0.0)
    h = x
    for (w_l, w_r, b) in layer_params:
        h = jnp.maximum((a @ h) @ w_l + h @ w_r + b, 0.0)
    onehot = (batch[None, :] == jnp.arange(num_graphs)[:, None]).astype(jnp.float32)
    pooled = (onehot @ h) / jnp.maximum(onehot.sum(axis=1, keepdims=True), 1.0)
    return pooled @ w_fc + b_fc


# ----------------------------------- main ----------------------------------- #

if __name__ == "__main__":
    key = jax.random.PRNGKey(0)

    num_nodes = 16
    input_dim = 8
    hidden_dims = [32, 32]
    output_dim = 1
    num_graphs = 2

    k_x, k_p = jax.random.split(key)
    x = jax.random.normal(k_x, (num_nodes, input_dim), jnp.float32)

    # deterministic edge list (ring within each graph plus a few extra edges)
    src = jnp.array([0, 1, 2, 3, 4, 5, 6, 7, 8, 9, 10, 11, 12, 13, 14, 15, 0, 3, 8, 11],
                    jnp.int32)
    dst = jnp.array([1, 2, 3, 4, 5, 6, 7, 0, 9, 10, 11, 12, 13, 14, 15, 8, 4, 7, 12, 15],
                    jnp.int32)
    edge_index = jnp.stack([src, dst], axis=0)

    # first 8 nodes -> graph 0, last 8 nodes -> graph 1
    batch = jnp.concatenate([jnp.zeros(8, jnp.int32), jnp.ones(8, jnp.int32)])

    params = init_params(k_p, input_dim, hidden_dims, output_dim)
    layer_params, fc_params = params

    # ---- padded / packed operands for the fused kernel ----
    TM = TK = 256
    n_pad = max(2 * TM, _round_up(num_nodes, TM))   # >=2x2 tiles to exercise the grid
    g_pad = 8

    a_cnt, d_inv = build_adjacency_counts(edge_index, n_pad)      # bf16 counts, f32 1/deg
    p = build_mean_pool(batch, num_nodes, g_pad, n_pad)           # bf16 [g_pad, n_pad]
    x_pad = jnp.zeros((n_pad, LANE), jnp.float32)
    x_pad = x_pad.at[:num_nodes, :input_dim].set(x).astype(jnp.bfloat16)
    w_l_st, w_r_st, b_st, w_fc_pad, b_fc_pad = pack_params(layer_params, fc_params,
                                                           input_dim, hidden_dims)

    fwd = jax.jit(functools.partial(graph_sage_forward, tm=TM, tk=TK))
    out_full = fwd(x_pad, a_cnt, d_inv, w_l_st, w_r_st, b_st, p, w_fc_pad, b_fc_pad)
    out_full = jax.block_until_ready(out_full)
    out = out_full[:num_graphs, :output_dim]

    ref = reference(x, edge_index, batch, params, num_graphs)
    assert out.shape == (num_graphs, output_dim)
    assert jnp.allclose(out, ref, atol=3e-2, rtol=3e-2), (out, ref)

    print("KERNEL_OK")
</pallas_src>

<mosaic_0001>
module attributes {stable_mosaic.version = 11 : i64} {
  func.func @_fused_graphsage_kernel(%arg0: i32, %arg1: i32, %arg2: i32, %arg3: memref<512x128xbf16, #tpu.memory_space<any>>, %arg4: memref<256x256xbf16, #tpu.memory_space<vmem>>, %arg5: memref<256x1xf32, #tpu.memory_space<vmem>>, %arg6: memref<1x128x128xbf16, #tpu.memory_space<vmem>>, %arg7: memref<1x128x128xbf16, #tpu.memory_space<vmem>>, %arg8: memref<1x1x128xf32, #tpu.memory_space<vmem>>, %arg9: memref<8x256xbf16, #tpu.memory_space<vmem>>, %arg10: memref<128x128xf32, #tpu.memory_space<vmem>>, %arg11: memref<1x128xf32, #tpu.memory_space<vmem>>, %arg12: memref<8x128xf32, #tpu.memory_space<vmem>>, %arg13: memref<256x128xf32, #tpu.memory_space<vmem>>, %arg14: memref<1024x128xbf16, #tpu.memory_space<vmem>>, %arg15: memref<8x128xf32, #tpu.memory_space<vmem>>, %arg16: memref<!tpu.dma_semaphore, #tpu.memory_space<semaphore_mem>>) attributes {dimension_semantics = [#tpu.dimension_semantics<arbitrary>, #tpu.dimension_semantics<arbitrary>, #tpu.dimension_semantics<arbitrary>], iteration_bounds = array<i64: 2, 2, 2>, scalar_prefetch = 0 : i64, scratch_operands = 4 : i64, tpu.core_type = #tpu.core_type<tc>, window_params = [{}, {transform_indices = @transform_1, window_bounds = array<i64: 256, 256>}, {transform_indices = @transform_2, window_bounds = array<i64: 256, 1>}, {transform_indices = @transform_3, window_bounds = array<i64: 1, 128, 128>}, {transform_indices = @transform_4, window_bounds = array<i64: 1, 128, 128>}, {transform_indices = @transform_5, window_bounds = array<i64: 1, 1, 128>}, {transform_indices = @transform_6, window_bounds = array<i64: 8, 256>}, {pipeline_mode = #tpu.pipeline_mode<synchronous>, transform_indices = @transform_7, window_bounds = array<i64: 128, 128>}, {pipeline_mode = #tpu.pipeline_mode<synchronous>, transform_indices = @transform_8, window_bounds = array<i64: 1, 128>}, {pipeline_mode = #tpu.pipeline_mode<synchronous>, transform_indices = @transform_9, window_bounds = array<i64: 8, 128>}]} {
    %c1_i32 = arith.constant 1 : i32
    %0 = arith.addi %arg0, %c1_i32 : i32
    %c2_i32 = arith.constant 2 : i32
    %c0_i32 = arith.constant 0 : i32
    %1 = arith.cmpi eq, %c2_i32, %c0_i32 : i32
    %c1_i32_0 = arith.constant 1 : i32
    %2 = arith.select %1, %c1_i32_0, %c2_i32 : i32
    %3 = arith.remsi %0, %2 : i32
    %c0_i32_1 = arith.constant 0 : i32
    %4 = arith.cmpi ne, %3, %c0_i32_1 : i32
    %c0_i32_2 = arith.constant 0 : i32
    %5 = arith.cmpi slt, %3, %c0_i32_2 : i32
    %c0_i32_3 = arith.constant 0 : i32
    %6 = arith.cmpi slt, %2, %c0_i32_3 : i32
    %7 = arith.xori %5, %6 : i1
    %8 = arith.andi %7, %4 : i1
    %9 = arith.addi %3, %2 : i32
    %10 = arith.select %8, %9, %3 : i32
    %c512_i32 = arith.constant 512 : i32
    %11 = arith.muli %10, %c512_i32 : i32
    %c2_i32_4 = arith.constant 2 : i32
    %c0_i32_5 = arith.constant 0 : i32
    %12 = arith.cmpi eq, %c2_i32_4, %c0_i32_5 : i32
    %c1_i32_6 = arith.constant 1 : i32
    %13 = arith.select %12, %c1_i32_6, %c2_i32_4 : i32
    %14 = arith.remsi %arg0, %13 : i32
    %c0_i32_7 = arith.constant 0 : i32
    %15 = arith.cmpi ne, %14, %c0_i32_7 : i32
    %c0_i32_8 = arith.constant 0 : i32
    %16 = arith.cmpi slt, %14, %c0_i32_8 : i32
    %c0_i32_9 = arith.constant 0 : i32
    %17 = arith.cmpi slt, %13, %c0_i32_9 : i32
    %18 = arith.xori %16, %17 : i1
    %19 = arith.andi %18, %15 : i1
    %20 = arith.addi %14, %13 : i32
    %21 = arith.select %19, %20, %14 : i32
    %c512_i32_10 = arith.constant 512 : i32
    %22 = arith.muli %21, %c512_i32_10 : i32
    %c0_i32_11 = arith.constant 0 : i32
    %23 = arith.cmpi eq, %arg0, %c0_i32_11 : i32
    %c0_i32_12 = arith.constant 0 : i32
    %24 = arith.cmpi eq, %arg1, %c0_i32_12 : i32
    %25 = arith.andi %23, %24 : i1
    %c0_i32_13 = arith.constant 0 : i32
    %26 = arith.cmpi eq, %arg2, %c0_i32_13 : i32
    %27 = arith.andi %25, %26 : i1
    %28 = arith.extui %27 : i1 to i32
    %c0_i32_14 = arith.constant 0 : i32
    %29 = arith.cmpi ne, %28, %c0_i32_14 : i32
    scf.if %29 {
      %c512_i32_25 = arith.constant 512 : i32
      %c0_i32_26 = arith.constant 0 : i32
      %46 = tpu.memref_slice %arg14[%c512_i32_25, %c0_i32_26] : memref<1024x128xbf16, #tpu.memory_space<vmem>> -> memref<512x128xbf16, #tpu.memory_space<vmem>>
      tpu.enqueue_dma source(%arg3 : memref<512x128xbf16, #tpu.memory_space<any>>) target(%46 : memref<512x128xbf16, #tpu.memory_space<vmem>>) target_semaphore(%arg16 : memref<!tpu.dma_semaphore, #tpu.memory_space<semaphore_mem>>)
      %c512_i32_27 = arith.constant 512 : i32
      %c0_i32_28 = arith.constant 0 : i32
      %47 = tpu.memref_slice %arg14[%c512_i32_27, %c0_i32_28] : memref<1024x128xbf16, #tpu.memory_space<vmem>> -> memref<512x128xbf16, #tpu.memory_space<vmem>>
      tpu.wait_dma2 semaphore(%arg16 : memref<!tpu.dma_semaphore, #tpu.memory_space<semaphore_mem>>) src(%arg3 : memref<512x128xbf16, #tpu.memory_space<any>>) dst(%47 : memref<512x128xbf16, #tpu.memory_space<vmem>>)
    } else {
    }
    %c0_i32_15 = arith.constant 0 : i32
    %30 = arith.cmpi eq, %arg2, %c0_i32_15 : i32
    %31 = arith.extui %30 : i1 to i32
    %c0_i32_16 = arith.constant 0 : i32
    %32 = arith.cmpi ne, %31, %c0_i32_16 : i32
    scf.if %32 {
      %cst_25 = arith.constant 0.000000e+00 : f32
      %46 = vector.broadcast %cst_25 : f32 to vector<256x128xf32>
      %c0_26 = arith.constant 0 : index
      %c0_27 = arith.constant 0 : index
      %47 = vector.load %arg13[%c0_26, %c0_27] : memref<256x128xf32, #tpu.memory_space<vmem>>, vector<256x128xf32>
      tpu.vector_store %arg13[%c0_26, %c0_27], %46 {strides = array<i32>} : memref<256x128xf32, #tpu.memory_space<vmem>>, vector<256x128xf32>,
    } else {
    }
    %c256_i32 = arith.constant 256 : i32
    %33 = arith.muli %arg2, %c256_i32 : i32
    %34 = arith.addi %11, %33 : i32
    %35 = tpu.assume_multiple %34, 128 : i32
    %36 = arith.index_cast %35 : i32 to index
    %c0 = arith.constant 0 : index
    %37 = vector.load %arg14[%36, %c0] : memref<1024x128xbf16, #tpu.memory_space<vmem>>, vector<256x128xbf16>
    %c0_17 = arith.constant 0 : index
    %c0_18 = arith.constant 0 : index
    %38 = vector.load %arg13[%c0_17, %c0_18] : memref<256x128xf32, #tpu.memory_space<vmem>>, vector<256x128xf32>
    %c0_19 = arith.constant 0 : index
    %c0_20 = arith.constant 0 : index
    %39 = vector.load %arg4[%c0_19, %c0_20] : memref<256x256xbf16, #tpu.memory_space<vmem>>, vector<256x256xbf16>
    %cst = arith.constant dense<0.000000e+00> : vector<256x128xf32>
    %40 = tpu.matmul %39, %37, %cst {dimension_numbers = #tpu.dot_dimension_numbers<[1], [0], [0], [1], [0, 0, 1, 1], [], []>} : vector<256x256xbf16>, vector<256x128xbf16>, vector<256x128xf32> -> vector<256x128xf32>
    %41 = arith.addf %38, %40 : vector<256x128xf32>
    %c0_21 = arith.constant 0 : index
    %c0_22 = arith.constant 0 : index
    %42 = vector.load %arg13[%c0_21, %c0_22] : memref<256x128xf32, #tpu.memory_space<vmem>>, vector<256x128xf32>
    tpu.vector_store %arg13[%c0_21, %c0_22], %41 {strides = array<i32>} : memref<256x128xf32, #tpu.memory_space<vmem>>, vector<256x128xf32>,
    %c1_i32_23 = arith.constant 1 : i32
    %43 = arith.cmpi eq, %arg2, %c1_i32_23 : i32
    %44 = arith.extui %43 : i1 to i32
    %c0_i32_24 = arith.constant 0 : i32
    %45 = arith.cmpi ne, %44, %c0_i32_24 : i32
    scf.if %45 {
      %c256_i32_25 = arith.constant 256 : i32
      %46 = arith.muli %arg1, %c256_i32_25 : i32
      %47 = arith.addi %11, %46 : i32
      %48 = tpu.assume_multiple %47, 128 : i32
      %49 = arith.index_cast %48 : i32 to index
      %c0_26 = arith.constant 0 : index
      %50 = vector.load %arg14[%49, %c0_26] : memref<1024x128xbf16, #tpu.memory_space<vmem>>, vector<256x128xbf16>
      %c0_27 = arith.constant 0 : index
      %c0_28 = arith.constant 0 : index
      %51 = vector.load %arg13[%c0_27, %c0_28] : memref<256x128xf32, #tpu.memory_space<vmem>>, vector<256x128xf32>
      %c0_29 = arith.constant 0 : index
      %c0_30 = arith.constant 0 : index
      %52 = vector.load %arg5[%c0_29, %c0_30] : memref<256x1xf32, #tpu.memory_space<vmem>>, vector<256x1xf32>
      %53 = vector.broadcast %52 : vector<256x1xf32> to vector<256x128xf32>
      %54 = arith.mulf %51, %53 : vector<256x128xf32>
      %55 = arith.truncf %54 : vector<256x128xf32> to vector<256x128xbf16>
      %c0_31 = arith.constant 0 : index
      %c0_32 = arith.constant 0 : index
      %c0_33 = arith.constant 0 : index
      %56 = vector.load %arg6[%c0_31, %c0_32, %c0_33] : memref<1x128x128xbf16, #tpu.memory_space<vmem>>, vector<1x128x128xbf16>
      %57 = vector.shape_cast %56 : vector<1x128x128xbf16> to vector<128x128xbf16>
      %cst_34 = arith.constant dense<0.000000e+00> : vector<256x128xf32>
      %58 = tpu.matmul %55, %57, %cst_34 {dimension_numbers = #tpu.dot_dimension_numbers<[1], [0], [0], [1], [0, 0, 1, 1], [], []>} : vector<256x128xbf16>, vector<128x128xbf16>, vector<256x128xf32> -> vector<256x128xf32>
      %c0_35 = arith.constant 0 : index
      %c0_36 = arith.constant 0 : index
      %c0_37 = arith.constant 0 : index
      %59 = vector.load %arg7[%c0_35, %c0_36, %c0_37] : memref<1x128x128xbf16, #tpu.memory_space<vmem>>, vector<1x128x128xbf16>
      %60 = vector.shape_cast %59 : vector<1x128x128xbf16> to vector<128x128xbf16>
      %cst_38 = arith.constant dense<0.000000e+00> : vector<256x128xf32>
      %61 = tpu.matmul %50, %60, %cst_38 {dimension_numbers = #tpu.dot_dimension_numbers<[1], [0], [0], [1], [0, 0, 1, 1], [], []>} : vector<256x128xbf16>, vector<128x128xbf16>, vector<256x128xf32> -> vector<256x128xf32>
      %62 = arith.addf %58, %61 : vector<256x128xf32>
      %c0_39 = arith.constant 0 : index
      %c0_40 = arith.constant 0 : index
      %c0_41 = arith.constant 0 : index
      %63 = vector.load %arg8[%c0_39, %c0_40, %c0_41] : memref<1x1x128xf32, #tpu.memory_space<vmem>>, vector<1x1x128xf32>
      %64 = vector.shape_cast %63 : vector<1x1x128xf32> to vector<1x128xf32>
      %65 = vector.broadcast %64 : vector<1x128xf32> to vector<256x128xf32>
      %66 = arith.addf %62, %65 : vector<256x128xf32>
      %cst_42 = arith.constant 0.000000e+00 : f32
      %67 = vector.broadcast %cst_42 : f32 to vector<256x128xf32>
      %68 = arith.maximumf %66, %67 : vector<256x128xf32>
      %69 = arith.truncf %68 : vector<256x128xf32> to vector<256x128xbf16>
      %c256_i32_43 = arith.constant 256 : i32
      %70 = arith.muli %arg1, %c256_i32_43 : i32
      %71 = arith.addi %22, %70 : i32
      %72 = tpu.assume_multiple %71, 128 : i32
      %73 = arith.index_cast %72 : i32 to index
      %c0_44 = arith.constant 0 : index
      %74 = vector.load %arg14[%73, %c0_44] : memref<1024x128xbf16, #tpu.memory_space<vmem>>, vector<256x128xbf16>
      tpu.vector_store %arg14[%73, %c0_44], %69 {strides = array<i32>} : memref<1024x128xbf16, #tpu.memory_space<vmem>>, vector<256x128xbf16>,
      %c1_i32_45 = arith.constant 1 : i32
      %75 = arith.cmpi eq, %arg0, %c1_i32_45 : i32
      %76 = arith.extui %75 : i1 to i32
      %c0_i32_46 = arith.constant 0 : i32
      %77 = arith.cmpi ne, %76, %c0_i32_46 : i32
      scf.if %77 {
        %c0_i32_47 = arith.constant 0 : i32
        %78 = arith.cmpi eq, %arg1, %c0_i32_47 : i32
        %79 = arith.extui %78 : i1 to i32
        %c0_i32_48 = arith.constant 0 : i32
        %80 = arith.cmpi ne, %79, %c0_i32_48 : i32
        scf.if %80 {
          %cst_58 = arith.constant 0.000000e+00 : f32
          %89 = vector.broadcast %cst_58 : f32 to vector<8x128xf32>
          %c0_59 = arith.constant 0 : index
          %c0_60 = arith.constant 0 : index
          %90 = vector.load %arg15[%c0_59, %c0_60] : memref<8x128xf32, #tpu.memory_space<vmem>>, vector<8x128xf32>
          tpu.vector_store %arg15[%c0_59, %c0_60], %89 {strides = array<i32>} : memref<8x128xf32, #tpu.memory_space<vmem>>, vector<8x128xf32>,
        } else {
        }
        %c0_49 = arith.constant 0 : index
        %c0_50 = arith.constant 0 : index
        %81 = vector.load %arg15[%c0_49, %c0_50] : memref<8x128xf32, #tpu.memory_space<vmem>>, vector<8x128xf32>
        %c0_51 = arith.constant 0 : index
        %c0_52 = arith.constant 0 : index
        %82 = vector.load %arg9[%c0_51, %c0_52] : memref<8x256xbf16, #tpu.memory_space<vmem>>, vector<8x256xbf16>
        %cst_53 = arith.constant dense<0.000000e+00> : vector<8x128xf32>
        %83 = tpu.matmul %82, %69, %cst_53 {dimension_numbers = #tpu.dot_dimension_numbers<[1], [0], [0], [1], [0, 0, 1, 1], [], []>} : vector<8x256xbf16>, vector<256x128xbf16>, vector<8x128xf32> -> vector<8x128xf32>
        %84 = arith.addf %81, %83 : vector<8x128xf32>
        %c0_54 = arith.constant 0 : index
        %c0_55 = arith.constant 0 : index
        %85 = vector.load %arg15[%c0_54, %c0_55] : memref<8x128xf32, #tpu.memory_space<vmem>>, vector<8x128xf32>
        tpu.vector_store %arg15[%c0_54, %c0_55], %84 {strides = array<i32>} : memref<8x128xf32, #tpu.memory_space<vmem>>, vector<8x128xf32>,
        %c1_i32_56 = arith.constant 1 : i32
        %86 = arith.cmpi eq, %arg1, %c1_i32_56 : i32
        %87 = arith.extui %86 : i1 to i32
        %c0_i32_57 = arith.constant 0 : i32
        %88 = arith.cmpi ne, %87, %c0_i32_57 : i32
        scf.if %88 {
          %c0_58 = arith.constant 0 : index
          %c0_59 = arith.constant 0 : index
          %89 = vector.load %arg15[%c0_58, %c0_59] : memref<8x128xf32, #tpu.memory_space<vmem>>, vector<8x128xf32>
          %c0_60 = arith.constant 0 : index
          %c0_61 = arith.constant 0 : index
          %90 = vector.load %arg10[%c0_60, %c0_61] : memref<128x128xf32, #tpu.memory_space<vmem>>, vector<128x128xf32>
          %cst_62 = arith.constant dense<0.000000e+00> : vector<8x128xf32>
          %91 = tpu.matmul %89, %90, %cst_62 {dimension_numbers = #tpu.dot_dimension_numbers<[1], [0], [0], [1], [0, 0, 1, 1], [], []>} : vector<8x128xf32>, vector<128x128xf32>, vector<8x128xf32> -> vector<8x128xf32>
          %c0_63 = arith.constant 0 : index
          %c0_64 = arith.constant 0 : index
          %92 = vector.load %arg11[%c0_63, %c0_64] : memref<1x128xf32, #tpu.memory_space<vmem>>, vector<1x128xf32>
          %93 = vector.broadcast %92 : vector<1x128xf32> to vector<8x128xf32>
          %94 = arith.addf %91, %93 : vector<8x128xf32>
          %c0_65 = arith.constant 0 : index
          %c0_66 = arith.constant 0 : index
          %95 = vector.load %arg12[%c0_65, %c0_66] : memref<8x128xf32, #tpu.memory_space<vmem>>, vector<8x128xf32>
          tpu.vector_store %arg12[%c0_65, %c0_66], %94 {strides = array<i32>} : memref<8x128xf32, #tpu.memory_space<vmem>>, vector<8x128xf32>,
        } else {
        }
      } else {
      }
    } else {
    }
    return
  }
  func.func @transform_1(%arg0: i32, %arg1: i32, %arg2: i32) -> (i32, i32) {
    %c0_i32 = arith.constant 0 : i32
    return %arg1, %arg2 : i32, i32
  }
  func.func @transform_2(%arg0: i32, %arg1: i32, %arg2: i32) -> (i32, i32) {
    %c0_i32 = arith.constant 0 : i32
    %c0_i32_0 = arith.constant 0 : i32
    return %arg1, %c0_i32 : i32, i32
  }
  func.func @transform_3(%arg0: i32, %arg1: i32, %arg2: i32) -> (i32, i32, i32) {
    %c0_i32 = arith.constant 0 : i32
    %c0_i32_0 = arith.constant 0 : i32
    %c0_i32_1 = arith.constant 0 : i32
    return %arg0, %c0_i32, %c0_i32_0 : i32, i32, i32
  }
  func.func @transform_4(%arg0: i32, %arg1: i32, %arg2: i32) -> (i32, i32, i32) {
    %c0_i32 = arith.constant 0 : i32
    %c0_i32_0 = arith.constant 0 : i32
    %c0_i32_1 = arith.constant 0 : i32
    return %arg0, %c0_i32, %c0_i32_0 : i32, i32, i32
  }
  func.func @transform_5(%arg0: i32, %arg1: i32, %arg2: i32) -> (i32, i32, i32) {
    %c0_i32 = arith.constant 0 : i32
    %c0_i32_0 = arith.constant 0 : i32
    %c0_i32_1 = arith.constant 0 : i32
    return %arg0, %c0_i32, %c0_i32_0 : i32, i32, i32
  }
  func.func @transform_6(%arg0: i32, %arg1: i32, %arg2: i32) -> (i32, i32) {
    %c0_i32 = arith.constant 0 : i32
    %c0_i32_0 = arith.constant 0 : i32
    return %c0_i32, %arg1 : i32, i32
  }
  func.func @transform_7(%arg0: i32, %arg1: i32, %arg2: i32) -> (i32, i32) {
    %c0_i32 = arith.constant 0 : i32
    %c0_i32_0 = arith.constant 0 : i32
    %c0_i32_1 = arith.constant 0 : i32
    return %c0_i32, %c0_i32_0 : i32, i32
  }
  func.func @transform_8(%arg0: i32, %arg1: i32, %arg2: i32) -> (i32, i32) {
    %c0_i32 = arith.constant 0 : i32
    %c0_i32_0 = arith.constant 0 : i32
    %c0_i32_1 = arith.constant 0 : i32
    return %c0_i32, %c0_i32_0 : i32, i32
  }
  func.func @transform_9(%arg0: i32, %arg1: i32, %arg2: i32) -> (i32, i32) {
    %c0_i32 = arith.constant 0 : i32
    %c0_i32_0 = arith.constant 0 : i32
    %c0_i32_1 = arith.constant 0 : i32
    return %c0_i32, %c0_i32_0 : i32, i32
  }
}

</mosaic_0001>

<llo_original>
// kernel: graph_sage_forward.1
$region0: #{graph_sage_forward.1}
  #allocation0 [shape = 'u32[]', space=smem, size = 0x4, offset = 0x4, fixed_abs, tag = 'smem constant byte address 0x4 - core index']
  #allocation1 [shape = 'u32[144,128]{1,0:T(1,128)}', space=vmem, size = 0x12000, scoped, tag = 'internal scratch']
  #allocation2 [shape = 'f32[256,128]{1,0:T(8,128)}', space=vmem, size = 0x20000, scoped, tag = 'scratch operand']
  #allocation3 [shape = 'bf16[1024,128]{1,0:T(16,128)(2,1)}', space=vmem, size = 0x40000, scoped, tag = 'scratch operand']
  #allocation4 [shape = 'f32[8,128]{1,0:T(8,128)}', space=vmem, size = 0x1000, scoped, tag = 'scratch operand']
  #allocation5 [shape = 's32[1]{0}', space=sflag, size = 0x4, scoped, tag = 'scratch operand']
  #allocation12 [shape = 's32[]', space=sflag, size = 0x4, offset = 0, fixed_abs, tag = 'sflag constant byte address 0x0 - dummy sync flag']
  %s0 = inlined_call_operand.vmem [shape: bf16[512,128], index: 0, kind: input, shape index: {}]
  %s1 = inlined_call_operand.hbm [shape: bf16[512,512], index: 1, kind: input, shape index: {}]
  %s2 = inlined_call_operand.vmem [shape: f32[512,1], index: 2, kind: input, shape index: {}]
  %s3 = inlined_call_operand.vmem [shape: bf16[2,128,128], index: 3, kind: input, shape index: {}]
  %s4 = inlined_call_operand.vmem [shape: bf16[2,128,128], index: 4, kind: input, shape index: {}]
  %s5 = inlined_call_operand.vmem [shape: f32[2,1,128], index: 5, kind: input, shape index: {}]
  %s6 = inlined_call_operand.vmem [shape: bf16[8,512], index: 6, kind: input, shape index: {}]
  %s7 = inlined_call_operand.hbm [shape: f32[128,128], index: 7, kind: input, shape index: {}]
  %s8 = inlined_call_operand.vmem [shape: f32[1,128], index: 8, kind: input, shape index: {}]
  %s9 = inlined_call_operand.hbm [shape: f32[8,128], index: 9, kind: output, shape index: {}]
  %s10 = sld [smem:[#allocation0]]
  $region131: #{graph_sage_forward.1} parent=0
    _
  %s12 = ssub.s32 1, %s10
  %s13 = scalar_select 0, %s12, %s10
  $region1: #{graph_sage_forward.1} parent=0
    #allocation6 [shape = 'u8[262144]{0}', space=vmem, size = 0x40000, scoped, tag = 'input window, operand 1']
    #allocation7 [shape = 's32[2]{0}', space=sflag, size = 0x8, scoped, tag = 'scoped memory for graph_sage_forward.1']
    #allocation8 [shape = 's32[2]{0}', space=sflag, size = 0x8, scoped, tag = 'scoped memory for graph_sage_forward.1']
    #allocation9 [shape = 'u8[65536]{0}', space=vmem, size = 0x10000, scoped, tag = 'input window, operand 7, single buffered']
    #allocation10 [shape = 's32[1]{0}', space=sflag, size = 0x4, scoped, tag = 'scoped memory for graph_sage_forward.1']
    #allocation11 [shape = 'u8[4096]{0}', space=vmem, size = 0x1000, scoped, tag = 'output window, operand 0, single buffered']
    %14 = vsyncpa [#allocation7], 0
    %s15 = scalar_lea.sflag [#allocation7], 1
    %16 = vsyncpa %s15, 0
    %17 = vsyncpa [#allocation10], 0
    %18 = vsyncpa [#allocation8], 0
    loop: start=0, step=1, limit=10
    $region2: #{graph_sage_forward.1} parent=1 // loop_pre_header
      _
    $region3: #{graph_sage_forward.1} parent=1 // loop_header
      %s20 = sphi 0, %s24
      %p21 = scmp.ge.s32.totalorder %s20, 10
      %s27 = sphi 0, %s46
      %s28 = sphi 0, %s42
      %s29 = sphi 0, %s38
      %s30 = sphi 0, %s27
      %s31 = sphi 0, %s28
      %s32 = sphi 0, %s29
      %s33 = sphi 0, %s30
      %s34 = sphi 0, %s31
      %s35 = sphi 0, %s32
      %s51 = sphi 0, %s53
      %s54 = sphi 0, %s51
      %s55 = sphi 0, %s54
      %s71 = sphi 0, %s55
      %s77 = sphi 0, %s79
      %s80 = sphi 0, %s77
      %s81 = sphi 0, %s80
      %s97 = sphi 0, %s81
      %s103 = sphi 0, %s105
      %s106 = sphi 0, %s103
      %s107 = sphi 0, %s106
      %s123 = sphi 0, %s107
      %s129 = sphi 0, %s131
      %s132 = sphi 0, %s129
      %s133 = sphi 0, %s132
      %s149 = sphi 0, %s133
      %s155 = sphi 0, %s157
      %s158 = sphi 0, %s155
      %s159 = sphi 0, %s158
      %s175 = sphi 0, %s159
      %s181 = sphi 0, %s183
      %s184 = sphi 0, %s181
      %s185 = sphi 0, %s184
      %s201 = sphi 0, %s185
      %s205 = sphi 0, %s205
      %s207 = sphi 0, %s205
      %s208 = sphi 0, %s207
      %s222 = sphi 0, %s208
      %s226 = sphi 0, %s226
      %s228 = sphi 0, %s226
      %s229 = sphi 0, %s228
      %s243 = sphi 0, %s229
      %s247 = sphi 0, %s247
      %s249 = sphi 0, %s247
      %s250 = sphi 0, %s249
      %s264 = sphi 0, %s250
    $region4: #{graph_sage_forward.1} parent=1 // loop_header_branch
      %23 = sbr.rel (%p21) target = $region8
    $region5: #{graph_sage_forward.1} parent=1 // loop_body
      %s25 = ssub.s32 %s20, 1
      %s26 = ssub.s32 %s20, 2
      %s36 = sadd.s32 1, %s29
      %p37 = scmp.ge.s32.totalorder %s36, 2
      %s38 = scalar_select %p37, 0, %s36
      %s39 = sadd.s32 1, %s28
      %s40 = scalar_select %p37, %s39, %s28
      %p41 = scmp.ge.s32.totalorder %s40, 2
      %s42 = scalar_select %p41, 0, %s40
      %s43 = sadd.s32 1, %s27
      %s44 = scalar_select %p41, %s43, %s27
      %p45 = scmp.ge.s32.totalorder %s44, 2
      %s46 = scalar_select %p45, 0, %s44
      %s47 = ssub.s32 %s28, %s42
      %s48 = ssub.s32 %s29, %s38
      %s49 = sor.u32 %s47, %s48
      %p50 = scmp.eq.s32.totalorder %s49, 0
      %s52 = sadd.s32 %s51, 1
      %s53 = scalar_select %p50, %s51, %s52
      %p56 = pneg %p50
      %p57 = scmp.eq.s32.totalorder %s20, 7
      %p58 = por %p56, %p57
      %p59 = scmp.ne.s32.totalorder %s51, %s54
      %p60 = scmp.eq.s32.totalorder %s20, 0
      %p61 = por %p59, %p60
      %p62 = scmp.ne.s32.totalorder %s51, %s54
      %p63 = scmp.eq.s32.totalorder %s25, 7
      %p64 = por %p62, %p63
      %p65 = scmp.ne.s32.totalorder %s54, %s55
      %p66 = scmp.eq.s32.totalorder %s25, 0
      %p67 = por %p65, %p66
      %p68 = scmp.ne.s32.totalorder %s54, %s55
      %p69 = scmp.eq.s32.totalorder %s26, 7
      %p70 = por %p68, %p69
      %p72 = scmp.ne.s32.totalorder %s55, %s71
      %p73 = scmp.eq.s32.totalorder %s26, 0
      %p74 = por %p72, %p73
      %s75 = ssub.s32 %s28, %s42
      %p76 = scmp.eq.s32.totalorder %s75, 0
      %s78 = sadd.s32 %s77, 1
      %s79 = scalar_select %p76, %s77, %s78
      %p82 = pneg %p76
      %p83 = scmp.eq.s32.totalorder %s20, 7
      %p84 = por %p82, %p83
      %p85 = scmp.ne.s32.totalorder %s77, %s80
      %p86 = scmp.eq.s32.totalorder %s20, 0
      %p87 = por %p85, %p86
      %p88 = scmp.ne.s32.totalorder %s77, %s80
      %p89 = scmp.eq.s32.totalorder %s25, 7
      %p90 = por %p88, %p89
      %p91 = scmp.ne.s32.totalorder %s80, %s81
      %p92 = scmp.eq.s32.totalorder %s25, 0
      %p93 = por %p91, %p92
      %p94 = scmp.ne.s32.totalorder %s80, %s81
      %p95 = scmp.eq.s32.totalorder %s26, 7
      %p96 = por %p94, %p95
      %p98 = scmp.ne.s32.totalorder %s81, %s97
      %p99 = scmp.eq.s32.totalorder %s26, 0
      %p100 = por %p98, %p99
      %s101 = ssub.s32 %s27, %s46
      %p102 = scmp.eq.s32.totalorder %s101, 0
      %s104 = sadd.s32 %s103, 1
      %s105 = scalar_select %p102, %s103, %s104
      %p108 = pneg %p102
      %p109 = scmp.eq.s32.totalorder %s20, 7
      %p110 = por %p108, %p109
      %p111 = scmp.ne.s32.totalorder %s103, %s106
      %p112 = scmp.eq.s32.totalorder %s20, 0
      %p113 = por %p111, %p112
      %p114 = scmp.ne.s32.totalorder %s103, %s106
      %p115 = scmp.eq.s32.totalorder %s25, 7
      %p116 = por %p114, %p115
      %p117 = scmp.ne.s32.totalorder %s106, %s107
      %p118 = scmp.eq.s32.totalorder %s25, 0
      %p119 = por %p117, %p118
      %p120 = scmp.ne.s32.totalorder %s106, %s107
      %p121 = scmp.eq.s32.totalorder %s26, 7
      %p122 = por %p120, %p121
      %p124 = scmp.ne.s32.totalorder %s107, %s123
      %p125 = scmp.eq.s32.totalorder %s26, 0
      %p126 = por %p124, %p125
      %s127 = ssub.s32 %s27, %s46
      %p128 = scmp.eq.s32.totalorder %s127, 0
      %s130 = sadd.s32 %s129, 1
      %s131 = scalar_select %p128, %s129, %s130
      %p134 = pneg %p128
      %p135 = scmp.eq.s32.totalorder %s20, 7
      %p136 = por %p134, %p135
      %p137 = scmp.ne.s32.totalorder %s129, %s132
      %p138 = scmp.eq.s32.totalorder %s20, 0
      %p139 = por %p137, %p138
      %p140 = scmp.ne.s32.totalorder %s129, %s132
      %p141 = scmp.eq.s32.totalorder %s25, 7
      %p142 = por %p140, %p141
      %p143 = scmp.ne.s32.totalorder %s132, %s133
      %p144 = scmp.eq.s32.totalorder %s25, 0
      %p145 = por %p143, %p144
      %p146 = scmp.ne.s32.totalorder %s132, %s133
      %p147 = scmp.eq.s32.totalorder %s26, 7
      %p148 = por %p146, %p147
      %p150 = scmp.ne.s32.totalorder %s133, %s149
      %p151 = scmp.eq.s32.totalorder %s26, 0
      %p152 = por %p150, %p151
      %s153 = ssub.s32 %s27, %s46
      %p154 = scmp.eq.s32.totalorder %s153, 0
      %s156 = sadd.s32 %s155, 1
      %s157 = scalar_select %p154, %s155, %s156
      %p160 = pneg %p154
      %p161 = scmp.eq.s32.totalorder %s20, 7
      %p162 = por %p160, %p161
      %p163 = scmp.ne.s32.totalorder %s155, %s158
      %p164 = scmp.eq.s32.totalorder %s20, 0
      %p165 = por %p163, %p164
      %p166 = scmp.ne.s32.totalorder %s155, %s158
      %p167 = scmp.eq.s32.totalorder %s25, 7
      %p168 = por %p166, %p167
      %p169 = scmp.ne.s32.totalorder %s158, %s159
      %p170 = scmp.eq.s32.totalorder %s25, 0
      %p171 = por %p169, %p170
      %p172 = scmp.ne.s32.totalorder %s158, %s159
      %p173 = scmp.eq.s32.totalorder %s26, 7
      %p174 = por %p172, %p173
      %p176 = scmp.ne.s32.totalorder %s159, %s175
      %p177 = scmp.eq.s32.totalorder %s26, 0
      %p178 = por %p176, %p177
      %s179 = ssub.s32 %s28, %s42
      %p180 = scmp.eq.s32.totalorder %s179, 0
      %s182 = sadd.s32 %s181, 1
      %s183 = scalar_select %p180, %s181, %s182
      %p186 = pneg %p180
      %p187 = scmp.eq.s32.totalorder %s20, 7
      %p188 = por %p186, %p187
      %p189 = scmp.ne.s32.totalorder %s181, %s184
      %p190 = scmp.eq.s32.totalorder %s20, 0
      %p191 = por %p189, %p190
      %p192 = scmp.ne.s32.totalorder %s181, %s184
      %p193 = scmp.eq.s32.totalorder %s25, 7
      %p194 = por %p192, %p193
      %p195 = scmp.ne.s32.totalorder %s184, %s185
      %p196 = scmp.eq.s32.totalorder %s25, 0
      %p197 = por %p195, %p196
      %p198 = scmp.ne.s32.totalorder %s184, %s185
      %p199 = scmp.eq.s32.totalorder %s26, 7
      %p200 = por %p198, %p199
      %p202 = scmp.ne.s32.totalorder %s185, %s201
      %p203 = scmp.eq.s32.totalorder %s26, 0
      %p204 = por %p202, %p203
      %s206 = sadd.s32 %s205, 1
      %p209 = scmp.eq.s32.totalorder %s20, 7
      %p210 = scmp.ne.s32.totalorder %s205, %s207
      %p211 = scmp.eq.s32.totalorder %s20, 0
      %p212 = por %p210, %p211
      %p213 = scmp.ne.s32.totalorder %s205, %s207
      %p214 = scmp.eq.s32.totalorder %s25, 7
      %p215 = por %p213, %p214
      %p216 = scmp.ne.s32.totalorder %s207, %s208
      %p217 = scmp.eq.s32.totalorder %s25, 0
      %p218 = por %p216, %p217
      %p219 = scmp.ne.s32.totalorder %s207, %s208
      %p220 = scmp.eq.s32.totalorder %s26, 7
      %p221 = por %p219, %p220
      %p223 = scmp.ne.s32.totalorder %s208, %s222
      %p224 = scmp.eq.s32.totalorder %s26, 0
      %p225 = por %p223, %p224
      %s227 = sadd.s32 %s226, 1
      %p230 = scmp.eq.s32.totalorder %s20, 7
      %p231 = scmp.ne.s32.totalorder %s226, %s228
      %p232 = scmp.eq.s32.totalorder %s20, 0
      %p233 = por %p231, %p232
      %p234 = scmp.ne.s32.totalorder %s226, %s228
      %p235 = scmp.eq.s32.totalorder %s25, 7
      %p236 = por %p234, %p235
      %p237 = scmp.ne.s32.totalorder %s228, %s229
      %p238 = scmp.eq.s32.totalorder %s25, 0
      %p239 = por %p237, %p238
      %p240 = scmp.ne.s32.totalorder %s228, %s229
      %p241 = scmp.eq.s32.totalorder %s26, 7
      %p242 = por %p240, %p241
      %p244 = scmp.ne.s32.totalorder %s229, %s243
      %p245 = scmp.eq.s32.totalorder %s26, 0
      %p246 = por %p244, %p245
      %s248 = sadd.s32 %s247, 1
      %p251 = scmp.eq.s32.totalorder %s20, 7
      %p252 = scmp.ne.s32.totalorder %s247, %s249
      %p253 = scmp.eq.s32.totalorder %s20, 0
      %p254 = por %p252, %p253
      %p255 = scmp.ne.s32.totalorder %s247, %s249
      %p256 = scmp.eq.s32.totalorder %s25, 7
      %p257 = por %p255, %p256
      %p258 = scmp.ne.s32.totalorder %s249, %s250
      %p259 = scmp.eq.s32.totalorder %s25, 0
      %p260 = por %p258, %p259
      %p261 = scmp.ne.s32.totalorder %s249, %s250
      %p262 = scmp.eq.s32.totalorder %s26, 7
      %p263 = por %p261, %p262
      %p265 = scmp.ne.s32.totalorder %s250, %s264
      %p266 = scmp.eq.s32.totalorder %s26, 0
      %p267 = por %p265, %p266
      %p268 = scmp.le.s32.totalorder 1, %s20
      %p269 = scmp.lt.s32.totalorder %s20, 9
      %p270 = pnand %p268, %p269
      %p271 = pneg %p270
      // Predicated region
      $region9: #{graph_sage_forward.1} parent=5 // pred_check
        _
      $region10: #{graph_sage_forward.1} parent=5 // pred_check_branch
        %273 = sbr.rel (%p270) target = $region12
      $region11: #{graph_sage_forward.1} parent=5 // pred_region
        %s274 = ssub.s32 %s20, 1
        // Predicated region
        $region13: #{graph_sage_forward.1} parent=11 // pred_check
          %p275 = pneg %p218
        $region14: #{graph_sage_forward.1} parent=11 // pred_check_branch
          %277 = sbr.rel (%p275) target = $region16
        $region15: #{graph_sage_forward.1} parent=11 // pred_region
          %s279 = ssub.s32 2048, 2048
          %280 = vsyncadd [#allocation10], %s279
          %s281 = sshll.u32 [#allocation9], 4
          %s282 = int_to_ptr.vmem [resolvable:$true] %s281
          %287 = dma.hbm_to_vmem [thread:$0]  %s7, 2048, %s282, [#allocation10], 128, 128, 8
        $region16: #{graph_sage_forward.1} parent=11 // pred_fallthru
          _
        // Predicated region
        $region17: #{graph_sage_forward.1} parent=11 // pred_check
          %p288 = pneg %p239
        $region18: #{graph_sage_forward.1} parent=11 // pred_check_branch
          %290 = sbr.rel (%p288) target = $region20
        $region19: #{graph_sage_forward.1} parent=11 // pred_region
          _
        $region20: #{graph_sage_forward.1} parent=11 // pred_fallthru
          _
      $region12: #{graph_sage_forward.1} parent=5 // pred_fallthru
        _
      %p291 = scmp.lt.s32.totalorder %s20, 8
      // Predicated region
      $region21: #{graph_sage_forward.1} parent=5 // pred_check
        %p292 = pneg %p291
      $region22: #{graph_sage_forward.1} parent=5 // pred_check_branch
        %294 = sbr.rel (%p292) target = $region24
      $region23: #{graph_sage_forward.1} parent=5 // pred_region
        // Predicated region
        $region25: #{graph_sage_forward.1} parent=23 // pred_check
          %p295 = pneg %p61
        $region26: #{graph_sage_forward.1} parent=23 // pred_check_branch
          %297 = sbr.rel (%p295) target = $region28
        $region27: #{graph_sage_forward.1} parent=23 // pred_region
          %s298 = sand.u32 %s51, 1
          %s299 = scalar_lea.sflag [#allocation7], %s298
          %s300 = sand.u32 %s51, 1
          %s301 = smul.addr %s300, 256
          %s302 = scalar_lea.vmem [#allocation6], %s301
          %s303 = smul.u32 32, %s28
          %s304 = smul.u32 2, %s29
          %s306 = ssub.s32 4096, 4096
          %307 = vsyncadd %s299, %s306
          %s308 = smul.addr %s303, 4
          %s309 = sadd.s32 %s304, %s308
          %s310 = smul.addr %s309, 64
          %s311 = scalar_lea.hbm %s1, %s310
          %s312 = sshll.u32 %s302, 4
          %s313 = int_to_ptr.vmem [resolvable:$true] %s312
          %318 = dma.hbm_to_vmem [thread:$0]  %s311, 4096, %s313, %s299, 256, 128, 8
        $region28: #{graph_sage_forward.1} parent=23 // pred_fallthru
          _
        // Predicated region
        $region29: #{graph_sage_forward.1} parent=23 // pred_check
          %p319 = pneg %p87
        $region30: #{graph_sage_forward.1} parent=23 // pred_check_branch
          %321 = sbr.rel (%p319) target = $region32
        $region31: #{graph_sage_forward.1} parent=23 // pred_region
          %s322 = smul.u32 32, %s28
          %p323 = scmp.lt.s32.totalorder %s322, 63
          %s324 = scalar_select %p323, %s322, 63
          %s325 = smul.addr %s324, 8
          %s326 = scalar_lea.vmem %s2, %s325
          %s327 = smul.u32 32, %s28
        $region32: #{graph_sage_forward.1} parent=23 // pred_fallthru
          _
        // Predicated region
        $region33: #{graph_sage_forward.1} parent=23 // pred_check
          %p328 = pneg %p113
        $region34: #{graph_sage_forward.1} parent=23 // pred_check_branch
          %330 = sbr.rel (%p328) target = $region36
        $region35: #{graph_sage_forward.1} parent=23 // pred_region
          %p331 = scmp.lt.s32.totalorder %s27, 1
          %s332 = scalar_select %p331, %s27, 1
          %s333 = smul.addr %s332, 16
          %s334 = smul.addr %s333, 4
          %s335 = scalar_lea.vmem %s3, %s334
        $region36: #{graph_sage_forward.1} parent=23 // pred_fallthru
          _
        // Predicated region
        $region37: #{graph_sage_forward.1} parent=23 // pred_check
          %p336 = pneg %p139
        $region38: #{graph_sage_forward.1} parent=23 // pred_check_branch
          %338 = sbr.rel (%p336) target = $region40
        $region39: #{graph_sage_forward.1} parent=23 // pred_region
          %p339 = scmp.lt.s32.totalorder %s27, 1
          %s340 = scalar_select %p339, %s27, 1
          %s341 = smul.addr %s340, 16
          %s342 = smul.addr %s341, 4
          %s343 = scalar_lea.vmem %s4, %s342
        $region40: #{graph_sage_forward.1} parent=23 // pred_fallthru
          _
        // Predicated region
        $region41: #{graph_sage_forward.1} parent=23 // pred_check
          %p344 = pneg %p165
        $region42: #{graph_sage_forward.1} parent=23 // pred_check_branch
          %346 = sbr.rel (%p344) target = $region44
        $region43: #{graph_sage_forward.1} parent=23 // pred_region
          %p347 = scmp.lt.s32.totalorder %s27, 1
          %s348 = scalar_select %p347, %s27, 1
          %s349 = scalar_lea.vmem %s5, %s348
        $region44: #{graph_sage_forward.1} parent=23 // pred_fallthru
          _
        // Predicated region
        $region45: #{graph_sage_forward.1} parent=23 // pred_check
          %p350 = pneg %p191
        $region46: #{graph_sage_forward.1} parent=23 // pred_check_branch
          %352 = sbr.rel (%p350) target = $region48
        $region47: #{graph_sage_forward.1} parent=23 // pred_region
          %s353 = smul.u32 2, %s28
          %p354 = scmp.lt.s32.totalorder %s353, 3
          %s355 = scalar_select %p354, %s353, 3
          %s356 = smul.addr %s355, 4
          %s357 = scalar_lea.vmem %s6, %s356
          %s358 = smul.u32 2, %s28
        $region48: #{graph_sage_forward.1} parent=23 // pred_fallthru
          _
      $region24: #{graph_sage_forward.1} parent=5 // pred_fallthru
        _
      %p359 = scmp.le.s32.totalorder 1, %s20
      %p360 = scmp.lt.s32.totalorder %s20, 9
      %p361 = pnand %p359, %p360
      %p362 = pneg %p361
      // Predicated region
      $region49: #{graph_sage_forward.1} parent=5 // pred_check
        _
      $region50: #{graph_sage_forward.1} parent=5 // pred_check_branch
        %364 = sbr.rel (%p361) target = $region52
      $region51: #{graph_sage_forward.1} parent=5 // pred_region
        %s365 = ssub.s32 %s20, 1
        %s366 = sand.u32 %s54, 1
        %s367 = scalar_lea.sflag [#allocation7], %s366
        %s368 = sand.u32 %s54, 1
        %s369 = smul.addr %s368, 256
        %s370 = scalar_lea.vmem [#allocation6], %s369
        // Predicated region
        $region53: #{graph_sage_forward.1} parent=51 // pred_check
          %p371 = pneg %p67
        $region54: #{graph_sage_forward.1} parent=51 // pred_check_branch
          %373 = sbr.rel (%p371) target = $region56
        $region55: #{graph_sage_forward.1} parent=51 // pred_region
          %374 = dma.done %s367, 4096
        $region56: #{graph_sage_forward.1} parent=51 // pred_fallthru
          _
        // Predicated region
        $region57: #{graph_sage_forward.1} parent=51 // pred_check
          %p375 = pneg %p218
        $region58: #{graph_sage_forward.1} parent=51 // pred_check_branch
          %377 = sbr.rel (%p375) target = $region60
        $region59: #{graph_sage_forward.1} parent=51 // pred_region
          %378 = dma.done [#allocation10], 2048
        $region60: #{graph_sage_forward.1} parent=51 // pred_fallthru
          _
        %s379 = sand.u32 %s54, 1
        %s380 = scalar_lea.sflag [#allocation7], %s379
        %s381 = sand.u32 %s54, 1
        %s382 = smul.addr %s381, 256
        %s383 = scalar_lea.vmem [#allocation6], %s382
        %p384 = pneg %p67
        %p385 = pneg %p64
        %s386 = smul.u32 32, %s31
        %p387 = scmp.lt.s32.totalorder %s386, 63
        %s388 = scalar_select %p387, %s386, 63
        %s389 = smul.addr %s388, 8
        %s390 = scalar_lea.vmem %s2, %s389
        %p391 = pneg %p93
        %p392 = pneg %p90
        %p393 = scmp.lt.s32.totalorder %s30, 1
        %s394 = scalar_select %p393, %s30, 1
        %s395 = smul.addr %s394, 16
        %s396 = smul.addr %s395, 4
        %s397 = scalar_lea.vmem %s3, %s396
        %p398 = pneg %p119
        %p399 = pneg %p116
        %p400 = scmp.lt.s32.totalorder %s30, 1
        %s401 = scalar_select %p400, %s30, 1
        %s402 = smul.addr %s401, 16
        %s403 = smul.addr %s402, 4
        %s404 = scalar_lea.vmem %s4, %s403
        %p405 = pneg %p145
        %p406 = pneg %p142
        %p407 = scmp.lt.s32.totalorder %s30, 1
        %s408 = scalar_select %p407, %s30, 1
        %s409 = scalar_lea.vmem %s5, %s408
        %p410 = pneg %p171
        %p411 = pneg %p168
        %s412 = smul.u32 2, %s31
        %p413 = scmp.lt.s32.totalorder %s412, 3
        %s414 = scalar_select %p413, %s412, 3
        %s415 = smul.addr %s414, 4
        %s416 = scalar_lea.vmem %s6, %s415
        %p417 = pneg %p197
        %p418 = pneg %p194
        %p419 = pneg %p218
        %p420 = pneg %p215
        %p421 = pneg %p239
        %p422 = pneg %p236
        %p423 = pneg %p260
        %p424 = pneg %p257
        %s425 = smul.u32 32, %s31
        %s426 = smul.u32 2, %s32
        %s427 = smul.u32 32, %s31
        %p428 = scmp.lt.s32.totalorder %s427, 63
        %s429 = scalar_select %p428, %s427, 63
        %s430 = smul.addr %s429, 8
        %s431 = scalar_lea.vmem %s2, %s430
        %s432 = smul.u32 32, %s31
        %p433 = scmp.lt.s32.totalorder %s30, 1
        %s434 = scalar_select %p433, %s30, 1
        %s435 = smul.addr %s434, 16
        %s436 = smul.addr %s435, 4
        %s437 = scalar_lea.vmem %s3, %s436
        %p438 = scmp.lt.s32.totalorder %s30, 1
        %s439 = scalar_select %p438, %s30, 1
        %s440 = smul.addr %s439, 16
        %s441 = smul.addr %s440, 4
        %s442 = scalar_lea.vmem %s4, %s441
        %p443 = scmp.lt.s32.totalorder %s30, 1
        %s444 = scalar_select %p443, %s30, 1
        %s445 = scalar_lea.vmem %s5, %s444
        %s446 = smul.u32 2, %s31
        %p447 = scmp.lt.s32.totalorder %s446, 3
        %s448 = scalar_select %p447, %s446, 3
        %s449 = smul.addr %s448, 4
        %s450 = scalar_lea.vmem %s6, %s449
        %s451 = smul.u32 2, %s31
        %s453 = sadd.s32 %s30, 1
        %p454 = scmp.lt.s32.totalorder %s453, 0
        %s455 = ssub.s32 0, %s453
        %s456 = scalar_select %p454, %s455, %s453
        %s457 = sand.u32 %s456, 1
        %s458 = ssub.s32 0, %s457
        %s459 = scalar_select %p454, %s458, %s457
        %p460 = scmp.ne.s32.totalorder %s459, 0
        %p461 = scmp.lt.s32.totalorder %s459, 0
        %p462 = pnand %p461, %p460
        %p463 = pneg %p462
        %s464 = sadd.s32 %s459, 2
        %s465 = scalar_select %p463, %s464, %s459
        %s466 = smul.u32 %s465, 512
        %p467 = scmp.lt.s32.totalorder %s30, 0
        %s468 = ssub.s32 0, %s30
        %s469 = scalar_select %p467, %s468, %s30
        %s470 = sand.u32 %s469, 1
        %s471 = ssub.s32 0, %s470
        %s472 = scalar_select %p467, %s471, %s470
        %p473 = scmp.ne.s32.totalorder %s472, 0
        %p474 = scmp.lt.s32.totalorder %s472, 0
        %p475 = pnand %p474, %p473
        %p476 = pneg %p475
        %s477 = sadd.s32 %s472, 2
        %s478 = scalar_select %p476, %s477, %s472
        %s479 = smul.u32 %s478, 512
        %p480 = scmp.eq.s32.totalorder %s30, 0
        %p481 = scmp.eq.s32.totalorder %s31, 0
        %p482 = pnand %p480, %p481
        %p483 = pneg %p482
        %p484 = scmp.eq.s32.totalorder %s32, 0
        %p485 = pnand %p483, %p484
        %p486 = pneg %p485
        // Predicated region
        $region61: #{graph_sage_forward.1} parent=51 // pred_check
          _
        $region62: #{graph_sage_forward.1} parent=51 // pred_check_branch
          %488 = sbr.rel (%p485) target = $region64
        $region63: #{graph_sage_forward.1} parent=51 // pred_region
          %s489 = scalar_lea.vmem [#allocation3], 256
          %p491 = scmp.lt.u32.totalorder 256, 8
          %p492 = pneg %p491
          // Predicated region
          $region65: #{graph_sage_forward.1} parent=63 // pred_check
            _
          $region66: #{graph_sage_forward.1} parent=63 // pred_check_branch
            %494 = sbr.rel (%p491) target = $region68
          $region67: #{graph_sage_forward.1} parent=63 // pred_region
            %s509 = sand.u32 256, 7
            %p510 = scmp.eq.s32.totalorder %s509, 0
            // Predicated region
            $region80: #{graph_sage_forward.1} parent=67 // pred_check
              %p511 = pneg %p510
            $region81: #{graph_sage_forward.1} parent=67 // pred_check_branch
              %513 = sbr.rel (%p511) target = $region83
            $region82: #{graph_sage_forward.1} parent=67 // pred_region
              loop: start=0, step=1, limit=1
              $region84: #{graph_sage_forward.1} parent=82 // loop_pre_header
                _
              $region85: #{graph_sage_forward.1} parent=82 // loop_header
                %s515 = sphi 0, %s519
                %p516 = scmp.ge.s32.totalorder %s515, 1
                %s520 = sphi %s0, %s0
                %s521 = sphi %s489, %s489
              $region86: #{graph_sage_forward.1} parent=82 // loop_header_branch
                %518 = sbr.rel (%p516) target = $region90
              $region87: #{graph_sage_forward.1} parent=82 // loop_body
                %v522 = vld [vmem:[%s520] sm:$0xff]
                %523 = vst [vmem:[%s521] sm:$0xff] %v522
                %v524 = vld [vmem:[%s520 + $0x8] sm:$0xff]
                %525 = vst [vmem:[%s521 + $0x8] sm:$0xff] %v524
                %v526 = vld [vmem:[%s520 + $0x10] sm:$0xff]
                %527 = vst [vmem:[%s521 + $0x10] sm:$0xff] %v526
                %v528 = vld [vmem:[%s520 + $0x18] sm:$0xff]
                %529 = vst [vmem:[%s521 + $0x18] sm:$0xff] %v528
                %v530 = vld [vmem:[%s520 + $0x20] sm:$0xff]
                %531 = vst [vmem:[%s521 + $0x20] sm:$0xff] %v530
                %v532 = vld [vmem:[%s520 + $0x28] sm:$0xff]
                %533 = vst [vmem:[%s521 + $0x28] sm:$0xff] %v532
                %v534 = vld [vmem:[%s520 + $0x30] sm:$0xff]
                %535 = vst [vmem:[%s521 + $0x30] sm:$0xff] %v534
                %v536 = vld [vmem:[%s520 + $0x38] sm:$0xff]
                %537 = vst [vmem:[%s521 + $0x38] sm:$0xff] %v536
                %v538 = vld [vmem:[%s520 + $0x40] sm:$0xff]
                %539 = vst [vmem:[%s521 + $0x40] sm:$0xff] %v538
                %v540 = vld [vmem:[%s520 + $0x48] sm:$0xff]
                %541 = vst [vmem:[%s521 + $0x48] sm:$0xff] %v540
                %v542 = vld [vmem:[%s520 + $0x50] sm:$0xff]
                %543 = vst [vmem:[%s521 + $0x50] sm:$0xff] %v542
                %v544 = vld [vmem:[%s520 + $0x58] sm:$0xff]
                %545 = vst [vmem:[%s521 + $0x58] sm:$0xff] %v544
                %v546 = vld [vmem:[%s520 + $0x60] sm:$0xff]
                %547 = vst [vmem:[%s521 + $0x60] sm:$0xff] %v546
                %v548 = vld [vmem:[%s520 + $0x68] sm:$0xff]
                %549 = vst [vmem:[%s521 + $0x68] sm:$0xff] %v548
                %v550 = vld [vmem:[%s520 + $0x70] sm:$0xff]
                %551 = vst [vmem:[%s521 + $0x70] sm:$0xff] %v550
                %v552 = vld [vmem:[%s520 + $0x78] sm:$0xff]
                %553 = vst [vmem:[%s521 + $0x78] sm:$0xff] %v552
                %v554 = vld [vmem:[%s520 + $0x80] sm:$0xff]
                %555 = vst [vmem:[%s521 + $0x80] sm:$0xff] %v554
                %v556 = vld [vmem:[%s520 + $0x88] sm:$0xff]
                %557 = vst [vmem:[%s521 + $0x88] sm:$0xff] %v556
                %v558 = vld [vmem:[%s520 + $0x90] sm:$0xff]
                %559 = vst [vmem:[%s521 + $0x90] sm:$0xff] %v558
                %v560 = vld [vmem:[%s520 + $0x98] sm:$0xff]
                %561 = vst [vmem:[%s521 + $0x98] sm:$0xff] %v560
                %v562 = vld [vmem:[%s520 + $0xa0] sm:$0xff]
                %563 = vst [vmem:[%s521 + $0xa0] sm:$0xff] %v562
                %v564 = vld [vmem:[%s520 + $0xa8] sm:$0xff]
                %565 = vst [vmem:[%s521 + $0xa8] sm:$0xff] %v564
                %v566 = vld [vmem:[%s520 + $0xb0] sm:$0xff]
                %567 = vst [vmem:[%s521 + $0xb0] sm:$0xff] %v566
                %v568 = vld [vmem:[%s520 + $0xb8] sm:$0xff]
                %569 = vst [vmem:[%s521 + $0xb8] sm:$0xff] %v568
                %v570 = vld [vmem:[%s520 + $0xc0] sm:$0xff]
                %571 = vst [vmem:[%s521 + $0xc0] sm:$0xff] %v570
                %v572 = vld [vmem:[%s520 + $0xc8] sm:$0xff]
                %573 = vst [vmem:[%s521 + $0xc8] sm:$0xff] %v572
                %v574 = vld [vmem:[%s520 + $0xd0] sm:$0xff]
                %575 = vst [vmem:[%s521 + $0xd0] sm:$0xff] %v574
                %v576 = vld [vmem:[%s520 + $0xd8] sm:$0xff]
                %577 = vst [vmem:[%s521 + $0xd8] sm:$0xff] %v576
                %v578 = vld [vmem:[%s520 + $0xe0] sm:$0xff]
                %579 = vst [vmem:[%s521 + $0xe0] sm:$0xff] %v578
                %v580 = vld [vmem:[%s520 + $0xe8] sm:$0xff]
                %581 = vst [vmem:[%s521 + $0xe8] sm:$0xff] %v580
                %v582 = vld [vmem:[%s520 + $0xf0] sm:$0xff]
                %583 = vst [vmem:[%s521 + $0xf0] sm:$0xff] %v582
                %v584 = vld [vmem:[%s520 + $0xf8] sm:$0xff]
                %585 = vst [vmem:[%s521 + $0xf8] sm:$0xff] %v584
              $region88: #{graph_sage_forward.1} parent=82 // loop_footer
                %s519 = sadd.s32 1, %s515
              $region89: #{graph_sage_forward.1} parent=82 // loop_footer_branch
                %514 = sbr.rel target = $region85
              $region90: #{graph_sage_forward.1} parent=82 // loop_exit
                _
            $region83: #{graph_sage_forward.1} parent=67 // pred_fallthru
              _
            %p586 = pneg %p510
            // Predicated region
            $region91: #{graph_sage_forward.1} parent=67 // pred_check
              _
            $region92: #{graph_sage_forward.1} parent=67 // pred_check_branch
              %588 = sbr.rel (%p510) target = $region94
            $region93: #{graph_sage_forward.1} parent=67 // pred_region
              %s589 = sand.u32 256, 7
            $region94: #{graph_sage_forward.1} parent=67 // pred_fallthru
              _
          $region68: #{graph_sage_forward.1} parent=63 // pred_fallthru
            _
          // Predicated region
          $region69: #{graph_sage_forward.1} parent=63 // pred_check
            %p495 = pneg %p491
          $region70: #{graph_sage_forward.1} parent=63 // pred_check_branch
            %497 = sbr.rel (%p495) target = $region72
          $region71: #{graph_sage_forward.1} parent=63 // pred_region
            %s498 = sshllo.u32 0, 256
            loop: start=0, step=1, limit=1
            $region73: #{graph_sage_forward.1} parent=71 // loop_pre_header
              _
            $region74: #{graph_sage_forward.1} parent=71 // loop_header
              %s500 = sphi 0, %s504
              %p501 = scmp.ge.s32.totalorder %s500, 1
              %s505 = sphi %s0, %s0
              %s506 = sphi %s489, %s489
            $region75: #{graph_sage_forward.1} parent=71 // loop_header_branch
              %503 = sbr.rel (%p501) target = $region79
            $region76: #{graph_sage_forward.1} parent=71 // loop_body
              %v507 = vld [vmem:[%s505] sm:%s498]
              %508 = vst [vmem:[%s506] sm:%s498] %v507
            $region77: #{graph_sage_forward.1} parent=71 // loop_footer
              %s504 = sadd.s32 1, %s500
            $region78: #{graph_sage_forward.1} parent=71 // loop_footer_branch
              %499 = sbr.rel target = $region74
            $region79: #{graph_sage_forward.1} parent=71 // loop_exit
              _
          $region72: #{graph_sage_forward.1} parent=63 // pred_fallthru
            _
          // Predicated region
          $region95: #{graph_sage_forward.1} parent=63 // pred_check
            _
          $region96: #{graph_sage_forward.1} parent=63 // pred_check_branch
            %592 = sbr.rel (0) target = $region98
          $region97: #{graph_sage_forward.1} parent=63 // pred_region
            %593 = vsyncadd [#allocation5], 4096
          $region98: #{graph_sage_forward.1} parent=63 // pred_fallthru
            _
          %s594 = smul.u32 4, 64
          %s595 = smul.u32 %s594, 1
          %s596 = sshll.u32 %s595, 4
          %597 = dma.done [#allocation5], %s596
        $region64: #{graph_sage_forward.1} parent=51 // pred_fallthru
          _
        // Predicated region
        $region99: #{graph_sage_forward.1} parent=51 // pred_check
          %p598 = pneg %p484
        $region100: #{graph_sage_forward.1} parent=51 // pred_check_branch
          %600 = sbr.rel (%p598) target = $region102
        $region101: #{graph_sage_forward.1} parent=51 // pred_region
          %601 = vst [vmem:[#allocation2] sm:$0xff] 0.0
          %602 = vst [vmem:[#allocation2 + $0x8] sm:$0xff] 0.0
          %603 = vst [vmem:[#allocation2 + $0x10] sm:$0xff] 0.0
          %604 = vst [vmem:[#allocation2 + $0x18] sm:$0xff] 0.0
          %605 = vst [vmem:[#allocation2 + $0x20] sm:$0xff] 0.0
          %606 = vst [vmem:[#allocation2 + $0x28] sm:$0xff] 0.0
          %607 = vst [vmem:[#allocation2 + $0x30] sm:$0xff] 0.0
          %608 = vst [vmem:[#allocation2 + $0x38] sm:$0xff] 0.0
          %609 = vst [vmem:[#allocation2 + $0x40] sm:$0xff] 0.0
          %610 = vst [vmem:[#allocation2 + $0x48] sm:$0xff] 0.0
          %611 = vst [vmem:[#allocation2 + $0x50] sm:$0xff] 0.0
          %612 = vst [vmem:[#allocation2 + $0x58] sm:$0xff] 0.0
          %613 = vst [vmem:[#allocation2 + $0x60] sm:$0xff] 0.0
          %614 = vst [vmem:[#allocation2 + $0x68] sm:$0xff] 0.0
          %615 = vst [vmem:[#allocation2 + $0x70] sm:$0xff] 0.0
          %616 = vst [vmem:[#allocation2 + $0x78] sm:$0xff] 0.0
          %617 = vst [vmem:[#allocation2 + $0x80] sm:$0xff] 0.0
          %618 = vst [vmem:[#allocation2 + $0x88] sm:$0xff] 0.0
          %619 = vst [vmem:[#allocation2 + $0x90] sm:$0xff] 0.0
          %620 = vst [vmem:[#allocation2 + $0x98] sm:$0xff] 0.0
          %621 = vst [vmem:[#allocation2 + $0xa0] sm:$0xff] 0.0
          %622 = vst [vmem:[#allocation2 + $0xa8] sm:$0xff] 0.0
          %623 = vst [vmem:[#allocation2 + $0xb0] sm:$0xff] 0.0
          %624 = vst [vmem:[#allocation2 + $0xb8] sm:$0xff] 0.0
          %625 = vst [vmem:[#allocation2 + $0xc0] sm:$0xff] 0.0
          %626 = vst [vmem:[#allocation2 + $0xc8] sm:$0xff] 0.0
          %627 = vst [vmem:[#allocation2 + $0xd0] sm:$0xff] 0.0
          %628 = vst [vmem:[#allocation2 + $0xd8] sm:$0xff] 0.0
          %629 = vst [vmem:[#allocation2 + $0xe0] sm:$0xff] 0.0
          %630 = vst [vmem:[#allocation2 + $0xe8] sm:$0xff] 0.0
          %631 = vst [vmem:[#allocation2 + $0xf0] sm:$0xff] 0.0
          %632 = vst [vmem:[#allocation2 + $0xf8] sm:$0xff] 0.0
        $region102: #{graph_sage_forward.1} parent=51 // pred_fallthru
          _
        %s633 = smul.u32 %s32, 256
        %s634 = sadd.s32 %s466, %s633
        %s635 = sshra.s32 %s634, 4
        %s636 = sand.u32 %s634, 15
        %s637 = smul.addr %s635, 8
        %s638 = scalar_lea.vmem [#allocation3], %s637
        %v639 = vld [vmem:[%s638] sm:$0xff]
        %v640 = vld [vmem:[%s638 + $0x8] sm:$0xff]
        %v641 = vld [vmem:[%s638 + $0x10] sm:$0xff]
        %v642 = vld [vmem:[%s638 + $0x18] sm:$0xff]
        %v643 = vld [vmem:[%s638 + $0x20] sm:$0xff]
        %v644 = vld [vmem:[%s638 + $0x28] sm:$0xff]
        %v645 = vld [vmem:[%s638 + $0x30] sm:$0xff]
        %v646 = vld [vmem:[%s638 + $0x38] sm:$0xff]
        %v647 = vld [vmem:[%s638 + $0x40] sm:$0xff]
        %v648 = vld [vmem:[%s638 + $0x48] sm:$0xff]
        %v649 = vld [vmem:[%s638 + $0x50] sm:$0xff]
        %v650 = vld [vmem:[%s638 + $0x58] sm:$0xff]
        %v651 = vld [vmem:[%s638 + $0x60] sm:$0xff]
        %v652 = vld [vmem:[%s638 + $0x68] sm:$0xff]
        %v653 = vld [vmem:[%s638 + $0x70] sm:$0xff]
        %v654 = vld [vmem:[%s638 + $0x78] sm:$0xff]
        %v655 = vld [vmem:[#allocation2] sm:$0xff]
        %v656 = vld [vmem:[#allocation2 + $0x8] sm:$0xff]
        %v657 = vld [vmem:[#allocation2 + $0x10] sm:$0xff]
        %v658 = vld [vmem:[#allocation2 + $0x18] sm:$0xff]
        %v659 = vld [vmem:[#allocation2 + $0x20] sm:$0xff]
        %v660 = vld [vmem:[#allocation2 + $0x28] sm:$0xff]
        %v661 = vld [vmem:[#allocation2 + $0x30] sm:$0xff]
        %v662 = vld [vmem:[#allocation2 + $0x38] sm:$0xff]
        %v663 = vld [vmem:[#allocation2 + $0x40] sm:$0xff]
        %v664 = vld [vmem:[#allocation2 + $0x48] sm:$0xff]
        %v665 = vld [vmem:[#allocation2 + $0x50] sm:$0xff]
        %v666 = vld [vmem:[#allocation2 + $0x58] sm:$0xff]
        %v667 = vld [vmem:[#allocation2 + $0x60] sm:$0xff]
        %v668 = vld [vmem:[#allocation2 + $0x68] sm:$0xff]
        %v669 = vld [vmem:[#allocation2 + $0x70] sm:$0xff]
        %v670 = vld [vmem:[#allocation2 + $0x78] sm:$0xff]
        %v671 = vld [vmem:[#allocation2 + $0x80] sm:$0xff]
        %v672 = vld [vmem:[#allocation2 + $0x88] sm:$0xff]
        %v673 = vld [vmem:[#allocation2 + $0x90] sm:$0xff]
        %v674 = vld [vmem:[#allocation2 + $0x98] sm:$0xff]
        %v675 = vld [vmem:[#allocation2 + $0xa0] sm:$0xff]
        %v676 = vld [vmem:[#allocation2 + $0xa8] sm:$0xff]
        %v677 = vld [vmem:[#allocation2 + $0xb0] sm:$0xff]
        %v678 = vld [vmem:[#allocation2 + $0xb8] sm:$0xff]
        %v679 = vld [vmem:[#allocation2 + $0xc0] sm:$0xff]
        %v680 = vld [vmem:[#allocation2 + $0xc8] sm:$0xff]
        %v681 = vld [vmem:[#allocation2 + $0xd0] sm:$0xff]
        %v682 = vld [vmem:[#allocation2 + $0xd8] sm:$0xff]
        %v683 = vld [vmem:[#allocation2 + $0xe0] sm:$0xff]
        %v684 = vld [vmem:[#allocation2 + $0xe8] sm:$0xff]
        %v685 = vld [vmem:[#allocation2 + $0xf0] sm:$0xff]
        %v686 = vld [vmem:[#allocation2 + $0xf8] sm:$0xff]
        %v687 = vld [vmem:[%s370] sm:$0xff]
        %v688 = vld [vmem:[%s370 + $0x8] sm:$0xff]
        %v689 = vld [vmem:[%s370 + $0x10] sm:$0xff]
        %v690 = vld [vmem:[%s370 + $0x18] sm:$0xff]
        %v691 = vld [vmem:[%s370 + $0x20] sm:$0xff]
        %v692 = vld [vmem:[%s370 + $0x28] sm:$0xff]
        %v693 = vld [vmem:[%s370 + $0x30] sm:$0xff]
        %v694 = vld [vmem:[%s370 + $0x38] sm:$0xff]
        %v695 = vld [vmem:[%s370 + $0x40] sm:$0xff]
        %v696 = vld [vmem:[%s370 + $0x48] sm:$0xff]
        %v697 = vld [vmem:[%s370 + $0x50] sm:$0xff]
        %v698 = vld [vmem:[%s370 + $0x58] sm:$0xff]
        %v699 = vld [vmem:[%s370 + $0x60] sm:$0xff]
        %v700 = vld [vmem:[%s370 + $0x68] sm:$0xff]
        %v701 = vld [vmem:[%s370 + $0x70] sm:$0xff]
        %v702 = vld [vmem:[%s370 + $0x78] sm:$0xff]
        %v703 = vld [vmem:[%s370 + $0x80] sm:$0xff]
        %v704 = vld [vmem:[%s370 + $0x88] sm:$0xff]
        %v705 = vld [vmem:[%s370 + $0x90] sm:$0xff]
        %v706 = vld [vmem:[%s370 + $0x98] sm:$0xff]
        %v707 = vld [vmem:[%s370 + $0xa0] sm:$0xff]
        %v708 = vld [vmem:[%s370 + $0xa8] sm:$0xff]
        %v709 = vld [vmem:[%s370 + $0xb0] sm:$0xff]
        %v710 = vld [vmem:[%s370 + $0xb8] sm:$0xff]
        %v711 = vld [vmem:[%s370 + $0xc0] sm:$0xff]
        %v712 = vld [vmem:[%s370 + $0xc8] sm:$0xff]
        %v713 = vld [vmem:[%s370 + $0xd0] sm:$0xff]
        %v714 = vld [vmem:[%s370 + $0xd8] sm:$0xff]
        %v715 = vld [vmem:[%s370 + $0xe0] sm:$0xff]
        %v716 = vld [vmem:[%s370 + $0xe8] sm:$0xff]
        %v717 = vld [vmem:[%s370 + $0xf0] sm:$0xff]
        %v718 = vld [vmem:[%s370 + $0xf8] sm:$0xff]
        %v751 = vunpack.c.l.b16 %v687
        %v752 = vunpack.c.h.b16 %v687
        %v753 = vunpack.c.l.b16 %v688
        %v754 = vunpack.c.h.b16 %v688
        %v755 = vunpack.c.l.b16 %v689
        %v756 = vunpack.c.h.b16 %v689
        %v757 = vunpack.c.l.b16 %v690
        %v758 = vunpack.c.h.b16 %v690
        %v759 = vunpack.c.l.b16 %v691
        %v760 = vunpack.c.h.b16 %v691
        %v761 = vunpack.c.l.b16 %v692
        %v762 = vunpack.c.h.b16 %v692
        %v763 = vunpack.c.l.b16 %v693
        %v764 = vunpack.c.h.b16 %v693
        %v765 = vunpack.c.l.b16 %v694
        %v766 = vunpack.c.h.b16 %v694
        %v767 = vunpack.c.l.b16 %v695
        %v768 = vunpack.c.h.b16 %v695
        %v769 = vunpack.c.l.b16 %v696
        %v770 = vunpack.c.h.b16 %v696
        %v771 = vunpack.c.l.b16 %v697
        %v772 = vunpack.c.h.b16 %v697
        %v773 = vunpack.c.l.b16 %v698
        %v774 = vunpack.c.h.b16 %v698
        %v775 = vunpack.c.l.b16 %v699
        %v776 = vunpack.c.h.b16 %v699
        %v777 = vunpack.c.l.b16 %v700
        %v778 = vunpack.c.h.b16 %v700
        %v779 = vunpack.c.l.b16 %v701
        %v780 = vunpack.c.h.b16 %v701
        %v781 = vunpack.c.l.b16 %v702
        %v782 = vunpack.c.h.b16 %v702
        %v783 = vunpack.c.l.b16 %v703
        %v784 = vunpack.c.h.b16 %v703
        %v785 = vunpack.c.l.b16 %v704
        %v786 = vunpack.c.h.b16 %v704
        %v787 = vunpack.c.l.b16 %v705
        %v788 = vunpack.c.h.b16 %v705
        %v789 = vunpack.c.l.b16 %v706
        %v790 = vunpack.c.h.b16 %v706
        %v791 = vunpack.c.l.b16 %v707
        %v792 = vunpack.c.h.b16 %v707
        %v793 = vunpack.c.l.b16 %v708
        %v794 = vunpack.c.h.b16 %v708
        %v795 = vunpack.c.l.b16 %v709
        %v796 = vunpack.c.h.b16 %v709
        %v797 = vunpack.c.l.b16 %v710
        %v798 = vunpack.c.h.b16 %v710
        %v799 = vunpack.c.l.b16 %v711
        %v800 = vunpack.c.h.b16 %v711
        %v801 = vunpack.c.l.b16 %v712
        %v802 = vunpack.c.h.b16 %v712
        %v803 = vunpack.c.l.b16 %v713
        %v804 = vunpack.c.h.b16 %v713
        %v805 = vunpack.c.l.b16 %v714
        %v806 = vunpack.c.h.b16 %v714
        %v807 = vunpack.c.l.b16 %v715
        %v808 = vunpack.c.h.b16 %v715
        %v809 = vunpack.c.l.b16 %v716
        %v810 = vunpack.c.h.b16 %v716
        %v811 = vunpack.c.l.b16 %v717
        %v812 = vunpack.c.h.b16 %v717
        %v813 = vunpack.c.l.b16 %v718
        %v814 = vunpack.c.h.b16 %v718
        %v815 = vpack.c.b16 %v753, %v751
        %v816 = vpack.c.b16 %v754, %v752
        %v817 = vpack.c.b16 %v757, %v755
        %v818 = vpack.c.b16 %v758, %v756
        %v819 = vpack.c.b16 %v761, %v759
        %v820 = vpack.c.b16 %v762, %v760
        %v821 = vpack.c.b16 %v765, %v763
        %v822 = vpack.c.b16 %v766, %v764
        %v823 = vpack.c.b16 %v769, %v767
        %v824 = vpack.c.b16 %v770, %v768
        %v825 = vpack.c.b16 %v773, %v771
        %v826 = vpack.c.b16 %v774, %v772
        %v827 = vpack.c.b16 %v777, %v775
        %v828 = vpack.c.b16 %v778, %v776
        %v829 = vpack.c.b16 %v781, %v779
        %v830 = vpack.c.b16 %v782, %v780
        %v831 = vpack.c.b16 %v785, %v783
        %v832 = vpack.c.b16 %v786, %v784
        %v833 = vpack.c.b16 %v789, %v787
        %v834 = vpack.c.b16 %v790, %v788
        %v835 = vpack.c.b16 %v793, %v791
        %v836 = vpack.c.b16 %v794, %v792
        %v837 = vpack.c.b16 %v797, %v795
        %v838 = vpack.c.b16 %v798, %v796
        %v839 = vpack.c.b16 %v801, %v799
        %v840 = vpack.c.b16 %v802, %v800
        %v841 = vpack.c.b16 %v805, %v803
        %v842 = vpack.c.b16 %v806, %v804
        %v843 = vpack.c.b16 %v809, %v807
        %v844 = vpack.c.b16 %v810, %v808
        %v845 = vpack.c.b16 %v813, %v811
        %v846 = vpack.c.b16 %v814, %v812
        %879 = vmatprep.subr.bf16.mxu0 0
        %880 = vmatpush1.bf16.msra.mxu0 %v639
        %881 = vmatprep.subr.bf16.mxu0 0
        %882 = vmatpush1.bf16.msra.mxu0 %v640
        %883 = vmatprep.subr.bf16.mxu0 0
        %884 = vmatpush1.bf16.msra.mxu0 %v641
        %885 = vmatprep.subr.bf16.mxu0 0
        %886 = vmatpush1.bf16.msra.mxu0 %v642
        %887 = vmatprep.subr.bf16.mxu0 0
        %888 = vmatpush1.bf16.msra.mxu0 %v643
        %889 = vmatprep.subr.bf16.mxu0 0
        %890 = vmatpush1.bf16.msra.mxu0 %v644
        %891 = vmatprep.subr.bf16.mxu0 0
        %892 = vmatpush1.bf16.msra.mxu0 %v645
        %893 = vmatprep.subr.bf16.mxu0 0
        %894 = vmatpush1.bf16.msra.mxu0 %v646
        %895 = vmatprep.subr.bf16.mxu0 0
        %896 = vmatpush1.bf16.msra.mxu0 %v647
        %897 = vmatprep.subr.bf16.mxu0 0
        %898 = vmatpush1.bf16.msra.mxu0 %v648
        %899 = vmatprep.subr.bf16.mxu0 0
        %900 = vmatpush1.bf16.msra.mxu0 %v649
        %901 = vmatprep.subr.bf16.mxu0 0
        %902 = vmatpush1.bf16.msra.mxu0 %v650
        %903 = vmatprep.subr.bf16.mxu0 0
        %904 = vmatpush1.bf16.msra.mxu0 %v651
        %905 = vmatprep.subr.bf16.mxu0 0
        %906 = vmatpush1.bf16.msra.mxu0 %v652
        %907 = vmatprep.subr.bf16.mxu0 0
        %908 = vmatpush1.bf16.msra.mxu0 %v653
        %909 = vmatprep.subr.bf16.mxu0 0
        %910 = vmatpush1.bf16.msra.mxu0 %v654
        %911 = vmatprep.mubr.bf16.mxu0 %v816
        %912 = vmatmul.mubr.bf16.gmra.mrb[0].mxu0 %v815
        %v913 = vpop.f32.mrb[0].mxu0
        %v914 = vadd.f32 0.0, %v913
        %v915 = vpop.f32.mrb[0].mxu0
        %v916 = vpop.f32.mrb[0].mxu0
        %v917 = vadd.f32 0.0, %v916
        %v918 = vpop.f32.mrb[0].mxu0
        %919 = vmatprep.mubr.bf16.mxu0 %v818
        %920 = vmatmul.mubr.bf16.gmra.mrb[0].mxu0 %v817
        %v921 = vpop.f32.mrb[0].mxu0
        %v922 = vadd.f32 0.0, %v921
        %v923 = vpop.f32.mrb[0].mxu0
        %v924 = vpop.f32.mrb[0].mxu0
        %v925 = vadd.f32 0.0, %v924
        %v926 = vpop.f32.mrb[0].mxu0
        %927 = vmatprep.mubr.bf16.mxu0 %v820
        %928 = vmatmul.mubr.bf16.gmra.mrb[0].mxu0 %v819
        %v929 = vpop.f32.mrb[0].mxu0
        %v930 = vadd.f32 0.0, %v929
        %v931 = vpop.f32.mrb[0].mxu0
        %v932 = vpop.f32.mrb[0].mxu0
        %v933 = vadd.f32 0.0, %v932
        %v934 = vpop.f32.mrb[0].mxu0
        %935 = vmatprep.mubr.bf16.mxu0 %v822
        %936 = vmatmul.mubr.bf16.gmra.mrb[0].mxu0 %v821
        %v937 = vpop.f32.mrb[0].mxu0
        %v938 = vadd.f32 0.0, %v937
        %v939 = vpop.f32.mrb[0].mxu0
        %v940 = vpop.f32.mrb[0].mxu0
        %v941 = vadd.f32 0.0, %v940
        %v942 = vpop.f32.mrb[0].mxu0
        %943 = vmatprep.mubr.bf16.mxu0 %v824
        %944 = vmatmul.mubr.bf16.gmra.mrb[0].mxu0 %v823
        %v945 = vpop.f32.mrb[0].mxu0
        %v946 = vadd.f32 0.0, %v945
        %v947 = vpop.f32.mrb[0].mxu0
        %v948 = vpop.f32.mrb[0].mxu0
        %v949 = vadd.f32 0.0, %v948
        %v950 = vpop.f32.mrb[0].mxu0
        %951 = vmatprep.mubr.bf16.mxu0 %v826
        %952 = vmatmul.mubr.bf16.gmra.mrb[0].mxu0 %v825
        %v953 = vpop.f32.mrb[0].mxu0
        %v954 = vadd.f32 0.0, %v953
        %v955 = vpop.f32.mrb[0].mxu0
        %v956 = vpop.f32.mrb[0].mxu0
        %v957 = vadd.f32 0.0, %v956
        %v958 = vpop.f32.mrb[0].mxu0
        %959 = vmatprep.mubr.bf16.mxu0 %v828
        %960 = vmatmul.mubr.bf16.gmra.mrb[0].mxu0 %v827
        %v961 = vpop.f32.mrb[0].mxu0
        %v962 = vadd.f32 0.0, %v961
        %v963 = vpop.f32.mrb[0].mxu0
        %v964 = vpop.f32.mrb[0].mxu0
        %v965 = vadd.f32 0.0, %v964
        %v966 = vpop.f32.mrb[0].mxu0
        %967 = vmatprep.mubr.bf16.mxu0 %v830
        %968 = vmatmul.mubr.bf16.gmra.mrb[0].mxu0 %v829
        %v969 = vpop.f32.mrb[0].mxu0
        %v970 = vadd.f32 0.0, %v969
        %v971 = vpop.f32.mrb[0].mxu0
        %v972 = vpop.f32.mrb[0].mxu0
        %v973 = vadd.f32 0.0, %v972
        %v974 = vpop.f32.mrb[0].mxu0
        %975 = vmatprep.mubr.bf16.mxu0 %v832
        %976 = vmatmul.mubr.bf16.gmra.mrb[0].mxu0 %v831
        %v977 = vpop.f32.mrb[0].mxu0
        %v978 = vadd.f32 0.0, %v977
        %v979 = vpop.f32.mrb[0].mxu0
        %v980 = vpop.f32.mrb[0].mxu0
        %v981 = vadd.f32 0.0, %v980
        %v982 = vpop.f32.mrb[0].mxu0
        %983 = vmatprep.mubr.bf16.mxu0 %v834
        %984 = vmatmul.mubr.bf16.gmra.mrb[0].mxu0 %v833
        %v985 = vpop.f32.mrb[0].mxu0
        %v986 = vadd.f32 0.0, %v985
        %v987 = vpop.f32.mrb[0].mxu0
        %v988 = vpop.f32.mrb[0].mxu0
        %v989 = vadd.f32 0.0, %v988
        %v990 = vpop.f32.mrb[0].mxu0
        %991 = vmatprep.mubr.bf16.mxu0 %v836
        %992 = vmatmul.mubr.bf16.gmra.mrb[0].mxu0 %v835
        %v993 = vpop.f32.mrb[0].mxu0
        %v994 = vadd.f32 0.0, %v993
        %v995 = vpop.f32.mrb[0].mxu0
        %v996 = vpop.f32.mrb[0].mxu0
        %v997 = vadd.f32 0.0, %v996
        %v998 = vpop.f32.mrb[0].mxu0
        %999 = vmatprep.mubr.bf16.mxu0 %v838
        %1000 = vmatmul.mubr.bf16.gmra.mrb[0].mxu0 %v837
        %v1001 = vpop.f32.mrb[0].mxu0
        %v1002 = vadd.f32 0.0, %v1001
        %v1003 = vpop.f32.mrb[0].mxu0
        %v1004 = vpop.f32.mrb[0].mxu0
        %v1005 = vadd.f32 0.0, %v1004
        %v1006 = vpop.f32.mrb[0].mxu0
        %1007 = vmatprep.mubr.bf16.mxu0 %v840
        %1008 = vmatmul.mubr.bf16.gmra.mrb[0].mxu0 %v839
        %v1009 = vpop.f32.mrb[0].mxu0
        %v1010 = vadd.f32 0.0, %v1009
        %v1011 = vpop.f32.mrb[0].mxu0
        %v1012 = vpop.f32.mrb[0].mxu0
        %v1013 = vadd.f32 0.0, %v1012
        %v1014 = vpop.f32.mrb[0].mxu0
        %1015 = vmatprep.mubr.bf16.mxu0 %v842
        %1016 = vmatmul.mubr.bf16.gmra.mrb[0].mxu0 %v841
        %v1017 = vpop.f32.mrb[0].mxu0
        %v1018 = vadd.f32 0.0, %v1017
        %v1019 = vpop.f32.mrb[0].mxu0
        %v1020 = vpop.f32.mrb[0].mxu0
        %v1021 = vadd.f32 0.0, %v1020
        %v1022 = vpop.f32.mrb[0].mxu0
        %1023 = vmatprep.mubr.bf16.mxu0 %v844
        %1024 = vmatmul.mubr.bf16.gmra.mrb[0].mxu0 %v843
        %v1025 = vpop.f32.mrb[0].mxu0
        %v1026 = vadd.f32 0.0, %v1025
        %v1027 = vpop.f32.mrb[0].mxu0
        %v1028 = vpop.f32.mrb[0].mxu0
        %v1029 = vadd.f32 0.0, %v1028
        %v1030 = vpop.f32.mrb[0].mxu0
        %1031 = vmatprep.mubr.bf16.mxu0 %v846
        %1032 = vmatmul.mubr.bf16.gmra.mrb[0].mxu0 %v845
        %v1033 = vpop.f32.mrb[0].mxu0
        %v1034 = vadd.f32 0.0, %v1033
        %v1035 = vpop.f32.mrb[0].mxu0
        %v1036 = vpop.f32.mrb[0].mxu0
        %v1037 = vadd.f32 0.0, %v1036
        %v1038 = vpop.f32.mrb[0].mxu0
        %1039 = vdwg.mxu0
        %v1040 = vadd.f32 %v655, %v914
        %v1041 = vadd.f32 %v656, %v917
        %v1042 = vadd.f32 %v657, %v922
        %v1043 = vadd.f32 %v658, %v925
        %v1044 = vadd.f32 %v659, %v930
        %v1045 = vadd.f32 %v660, %v933
        %v1046 = vadd.f32 %v661, %v938
        %v1047 = vadd.f32 %v662, %v941
        %v1048 = vadd.f32 %v663, %v946
        %v1049 = vadd.f32 %v664, %v949
        %v1050 = vadd.f32 %v665, %v954
        %v1051 = vadd.f32 %v666, %v957
        %v1052 = vadd.f32 %v667, %v962
        %v1053 = vadd.f32 %v668, %v965
        %v1054 = vadd.f32 %v669, %v970
        %v1055 = vadd.f32 %v670, %v973
        %v1056 = vadd.f32 %v671, %v978
        %v1057 = vadd.f32 %v672, %v981
        %v1058 = vadd.f32 %v673, %v986
        %v1059 = vadd.f32 %v674, %v989
        %v1060 = vadd.f32 %v675, %v994
        %v1061 = vadd.f32 %v676, %v997
        %v1062 = vadd.f32 %v677, %v1002
        %v1063 = vadd.f32 %v678, %v1005
        %v1064 = vadd.f32 %v679, %v1010
        %v1065 = vadd.f32 %v680, %v1013
        %v1066 = vadd.f32 %v681, %v1018
        %v1067 = vadd.f32 %v682, %v1021
        %v1068 = vadd.f32 %v683, %v1026
        %v1069 = vadd.f32 %v684, %v1029
        %v1070 = vadd.f32 %v685, %v1034
        %v1071 = vadd.f32 %v686, %v1037
        %1072 = vst [vmem:[#allocation2] sm:$0xff] %v1040
        %1073 = vst [vmem:[#allocation2 + $0x8] sm:$0xff] %v1041
        %1074 = vst [vmem:[#allocation2 + $0x10] sm:$0xff] %v1042
        %1075 = vst [vmem:[#allocation2 + $0x18] sm:$0xff] %v1043
        %1076 = vst [vmem:[#allocation2 + $0x20] sm:$0xff] %v1044
        %1077 = vst [vmem:[#allocation2 + $0x28] sm:$0xff] %v1045
        %1078 = vst [vmem:[#allocation2 + $0x30] sm:$0xff] %v1046
        %1079 = vst [vmem:[#allocation2 + $0x38] sm:$0xff] %v1047
        %1080 = vst [vmem:[#allocation2 + $0x40] sm:$0xff] %v1048
        %1081 = vst [vmem:[#allocation2 + $0x48] sm:$0xff] %v1049
        %1082 = vst [vmem:[#allocation2 + $0x50] sm:$0xff] %v1050
        %1083 = vst [vmem:[#allocation2 + $0x58] sm:$0xff] %v1051
        %1084 = vst [vmem:[#allocation2 + $0x60] sm:$0xff] %v1052
        %1085 = vst [vmem:[#allocation2 + $0x68] sm:$0xff] %v1053
        %1086 = vst [vmem:[#allocation2 + $0x70] sm:$0xff] %v1054
        %1087 = vst [vmem:[#allocation2 + $0x78] sm:$0xff] %v1055
        %1088 = vst [vmem:[#allocation2 + $0x80] sm:$0xff] %v1056
        %1089 = vst [vmem:[#allocation2 + $0x88] sm:$0xff] %v1057
        %1090 = vst [vmem:[#allocation2 + $0x90] sm:$0xff] %v1058
        %1091 = vst [vmem:[#allocation2 + $0x98] sm:$0xff] %v1059
        %1092 = vst [vmem:[#allocation2 + $0xa0] sm:$0xff] %v1060
        %1093 = vst [vmem:[#allocation2 + $0xa8] sm:$0xff] %v1061
        %1094 = vst [vmem:[#allocation2 + $0xb0] sm:$0xff] %v1062
        %1095 = vst [vmem:[#allocation2 + $0xb8] sm:$0xff] %v1063
        %1096 = vst [vmem:[#allocation2 + $0xc0] sm:$0xff] %v1064
        %1097 = vst [vmem:[#allocation2 + $0xc8] sm:$0xff] %v1065
        %1098 = vst [vmem:[#allocation2 + $0xd0] sm:$0xff] %v1066
        %1099 = vst [vmem:[#allocation2 + $0xd8] sm:$0xff] %v1067
        %1100 = vst [vmem:[#allocation2 + $0xe0] sm:$0xff] %v1068
        %1101 = vst [vmem:[#allocation2 + $0xe8] sm:$0xff] %v1069
        %1102 = vst [vmem:[#allocation2 + $0xf0] sm:$0xff] %v1070
        %1103 = vst [vmem:[#allocation2 + $0xf8] sm:$0xff] %v1071
        %p1104 = scmp.eq.s32.totalorder %s32, 1
        // Predicated region
        $region103: #{graph_sage_forward.1} parent=51 // pred_check
          %p1105 = pneg %p1104
        $region104: #{graph_sage_forward.1} parent=51 // pred_check_branch
          %1107 = sbr.rel (%p1105) target = $region106
        $region105: #{graph_sage_forward.1} parent=51 // pred_region
          %s1108 = smul.u32 %s31, 256
          %s1109 = sadd.s32 %s466, %s1108
          %s1110 = sshra.s32 %s1109, 4
          %s1111 = sand.u32 %s1109, 15
          %s1112 = smul.addr %s1110, 8
          %s1113 = scalar_lea.vmem [#allocation3], %s1112
          %v1114 = vld [vmem:[%s1113] sm:$0xff]
          %v1115 = vld [vmem:[%s1113 + $0x8] sm:$0xff]
          %v1116 = vld [vmem:[%s1113 + $0x10] sm:$0xff]
          %v1117 = vld [vmem:[%s1113 + $0x18] sm:$0xff]
          %v1118 = vld [vmem:[%s1113 + $0x20] sm:$0xff]
          %v1119 = vld [vmem:[%s1113 + $0x28] sm:$0xff]
          %v1120 = vld [vmem:[%s1113 + $0x30] sm:$0xff]
          %v1121 = vld [vmem:[%s1113 + $0x38] sm:$0xff]
          %v1122 = vld [vmem:[%s1113 + $0x40] sm:$0xff]
          %v1123 = vld [vmem:[%s1113 + $0x48] sm:$0xff]
          %v1124 = vld [vmem:[%s1113 + $0x50] sm:$0xff]
          %v1125 = vld [vmem:[%s1113 + $0x58] sm:$0xff]
          %v1126 = vld [vmem:[%s1113 + $0x60] sm:$0xff]
          %v1127 = vld [vmem:[%s1113 + $0x68] sm:$0xff]
          %v1128 = vld [vmem:[%s1113 + $0x70] sm:$0xff]
          %v1129 = vld [vmem:[%s1113 + $0x78] sm:$0xff]
          %v1130 = vld [vmem:[#allocation2] sm:$0xff]
          %v1131 = vld [vmem:[#allocation2 + $0x8] sm:$0xff]
          %v1132 = vld [vmem:[#allocation2 + $0x10] sm:$0xff]
          %v1133 = vld [vmem:[#allocation2 + $0x18] sm:$0xff]
          %v1134 = vld [vmem:[#allocation2 + $0x20] sm:$0xff]
          %v1135 = vld [vmem:[#allocation2 + $0x28] sm:$0xff]
          %v1136 = vld [vmem:[#allocation2 + $0x30] sm:$0xff]
          %v1137 = vld [vmem:[#allocation2 + $0x38] sm:$0xff]
          %v1138 = vld [vmem:[#allocation2 + $0x40] sm:$0xff]
          %v1139 = vld [vmem:[#allocation2 + $0x48] sm:$0xff]
          %v1140 = vld [vmem:[#allocation2 + $0x50] sm:$0xff]
          %v1141 = vld [vmem:[#allocation2 + $0x58] sm:$0xff]
          %v1142 = vld [vmem:[#allocation2 + $0x60] sm:$0xff]
          %v1143 = vld [vmem:[#allocation2 + $0x68] sm:$0xff]
          %v1144 = vld [vmem:[#allocation2 + $0x70] sm:$0xff]
          %v1145 = vld [vmem:[#allocation2 + $0x78] sm:$0xff]
          %v1146 = vld [vmem:[#allocation2 + $0x80] sm:$0xff]
          %v1147 = vld [vmem:[#allocation2 + $0x88] sm:$0xff]
          %v1148 = vld [vmem:[#allocation2 + $0x90] sm:$0xff]
          %v1149 = vld [vmem:[#allocation2 + $0x98] sm:$0xff]
          %v1150 = vld [vmem:[#allocation2 + $0xa0] sm:$0xff]
          %v1151 = vld [vmem:[#allocation2 + $0xa8] sm:$0xff]
          %v1152 = vld [vmem:[#allocation2 + $0xb0] sm:$0xff]
          %v1153 = vld [vmem:[#allocation2 + $0xb8] sm:$0xff]
          %v1154 = vld [vmem:[#allocation2 + $0xc0] sm:$0xff]
          %v1155 = vld [vmem:[#allocation2 + $0xc8] sm:$0xff]
          %v1156 = vld [vmem:[#allocation2 + $0xd0] sm:$0xff]
          %v1157 = vld [vmem:[#allocation2 + $0xd8] sm:$0xff]
          %v1158 = vld [vmem:[#allocation2 + $0xe0] sm:$0xff]
          %v1159 = vld [vmem:[#allocation2 + $0xe8] sm:$0xff]
          %v1160 = vld [vmem:[#allocation2 + $0xf0] sm:$0xff]
          %v1161 = vld [vmem:[#allocation2 + $0xf8] sm:$0xff]
          %v1162 = vld [vmem:[%s431] sm:$0xff]
          %v1163 = vld [vmem:[%s431 + $0x8] sm:$0xff]
          %v1164 = vld [vmem:[%s431 + $0x10] sm:$0xff]
          %v1165 = vld [vmem:[%s431 + $0x18] sm:$0xff]
          %v1166 = vld [vmem:[%s431 + $0x20] sm:$0xff]
          %v1167 = vld [vmem:[%s431 + $0x28] sm:$0xff]
          %v1168 = vld [vmem:[%s431 + $0x30] sm:$0xff]
          %v1169 = vld [vmem:[%s431 + $0x38] sm:$0xff]
          %v1170 = vld [vmem:[%s431 + $0x40] sm:$0xff]
          %v1171 = vld [vmem:[%s431 + $0x48] sm:$0xff]
          %v1172 = vld [vmem:[%s431 + $0x50] sm:$0xff]
          %v1173 = vld [vmem:[%s431 + $0x58] sm:$0xff]
          %v1174 = vld [vmem:[%s431 + $0x60] sm:$0xff]
          %v1175 = vld [vmem:[%s431 + $0x68] sm:$0xff]
          %v1176 = vld [vmem:[%s431 + $0x70] sm:$0xff]
          %v1177 = vld [vmem:[%s431 + $0x78] sm:$0xff]
          %v1178 = vld [vmem:[%s431 + $0x80] sm:$0xff]
          %v1179 = vld [vmem:[%s431 + $0x88] sm:$0xff]
          %v1180 = vld [vmem:[%s431 + $0x90] sm:$0xff]
          %v1181 = vld [vmem:[%s431 + $0x98] sm:$0xff]
          %v1182 = vld [vmem:[%s431 + $0xa0] sm:$0xff]
          %v1183 = vld [vmem:[%s431 + $0xa8] sm:$0xff]
          %v1184 = vld [vmem:[%s431 + $0xb0] sm:$0xff]
          %v1185 = vld [vmem:[%s431 + $0xb8] sm:$0xff]
          %v1186 = vld [vmem:[%s431 + $0xc0] sm:$0xff]
          %v1187 = vld [vmem:[%s431 + $0xc8] sm:$0xff]
          %v1188 = vld [vmem:[%s431 + $0xd0] sm:$0xff]
          %v1189 = vld [vmem:[%s431 + $0xd8] sm:$0xff]
          %v1190 = vld [vmem:[%s431 + $0xe0] sm:$0xff]
          %v1191 = vld [vmem:[%s431 + $0xe8] sm:$0xff]
          %v1192 = vld [vmem:[%s431 + $0xf0] sm:$0xff]
          %v1193 = vld [vmem:[%s431 + $0xf8] sm:$0xff]
          %1195 = vset.pattern.permute.xlu0 0
          %1196 = vperm.xlu0 %1195, %v1162
          %v1197 = vpop.permute.xlu0 %1196
          %1200 = vset.pattern.permute.xlu0 0
          %1201 = vperm.xlu0 %1200, %v1163
          %v1202 = vpop.permute.xlu0 %1201
          %1205 = vset.pattern.permute.xlu0 0
          %1206 = vperm.xlu0 %1205, %v1164
          %v1207 = vpop.permute.xlu0 %1206
          %1210 = vset.pattern.permute.xlu0 0
          %1211 = vperm.xlu0 %1210, %v1165
          %v1212 = vpop.permute.xlu0 %1211
          %1215 = vset.pattern.permute.xlu0 0
          %1216 = vperm.xlu0 %1215, %v1166
          %v1217 = vpop.permute.xlu0 %1216
          %1220 = vset.pattern.permute.xlu0 0
          %1221 = vperm.xlu0 %1220, %v1167
          %v1222 = vpop.permute.xlu0 %1221
          %1225 = vset.pattern.permute.xlu0 0
          %1226 = vperm.xlu0 %1225, %v1168
          %v1227 = vpop.permute.xlu0 %1226
          %1230 = vset.pattern.permute.xlu0 0
          %1231 = vperm.xlu0 %1230, %v1169
          %v1232 = vpop.permute.xlu0 %1231
          %1235 = vset.pattern.permute.xlu0 0
          %1236 = vperm.xlu0 %1235, %v1170
          %v1237 = vpop.permute.xlu0 %1236
          %1240 = vset.pattern.permute.xlu0 0
          %1241 = vperm.xlu0 %1240, %v1171
          %v1242 = vpop.permute.xlu0 %1241
          %1245 = vset.pattern.permute.xlu0 0
          %1246 = vperm.xlu0 %1245, %v1172
          %v1247 = vpop.permute.xlu0 %1246
          %1250 = vset.pattern.permute.xlu0 0
          %1251 = vperm.xlu0 %1250, %v1173
          %v1252 = vpop.permute.xlu0 %1251
          %1255 = vset.pattern.permute.xlu0 0
          %1256 = vperm.xlu0 %1255, %v1174
          %v1257 = vpop.permute.xlu0 %1256
          %1260 = vset.pattern.permute.xlu0 0
          %1261 = vperm.xlu0 %1260, %v1175
          %v1262 = vpop.permute.xlu0 %1261
          %1265 = vset.pattern.permute.xlu0 0
          %1266 = vperm.xlu0 %1265, %v1176
          %v1267 = vpop.permute.xlu0 %1266
          %1270 = vset.pattern.permute.xlu0 0
          %1271 = vperm.xlu0 %1270, %v1177
          %v1272 = vpop.permute.xlu0 %1271
          %1275 = vset.pattern.permute.xlu0 0
          %1276 = vperm.xlu0 %1275, %v1178
          %v1277 = vpop.permute.xlu0 %1276
          %1280 = vset.pattern.permute.xlu0 0
          %1281 = vperm.xlu0 %1280, %v1179
          %v1282 = vpop.permute.xlu0 %1281
          %1285 = vset.pattern.permute.xlu0 0
          %1286 = vperm.xlu0 %1285, %v1180
          %v1287 = vpop.permute.xlu0 %1286
          %1290 = vset.pattern.permute.xlu0 0
          %1291 = vperm.xlu0 %1290, %v1181
          %v1292 = vpop.permute.xlu0 %1291
          %1295 = vset.pattern.permute.xlu0 0
          %1296 = vperm.xlu0 %1295, %v1182
          %v1297 = vpop.permute.xlu0 %1296
          %1300 = vset.pattern.permute.xlu0 0
          %1301 = vperm.xlu0 %1300, %v1183
          %v1302 = vpop.permute.xlu0 %1301
          %1305 = vset.pattern.permute.xlu0 0
          %1306 = vperm.xlu0 %1305, %v1184
          %v1307 = vpop.permute.xlu0 %1306
          %1310 = vset.pattern.permute.xlu0 0
          %1311 = vperm.xlu0 %1310, %v1185
          %v1312 = vpop.permute.xlu0 %1311
          %1315 = vset.pattern.permute.xlu0 0
          %1316 = vperm.xlu0 %1315, %v1186
          %v1317 = vpop.permute.xlu0 %1316
          %1320 = vset.pattern.permute.xlu0 0
          %1321 = vperm.xlu0 %1320, %v1187
          %v1322 = vpop.permute.xlu0 %1321
          %1325 = vset.pattern.permute.xlu0 0
          %1326 = vperm.xlu0 %1325, %v1188
          %v1327 = vpop.permute.xlu0 %1326
          %1330 = vset.pattern.permute.xlu0 0
          %1331 = vperm.xlu0 %1330, %v1189
          %v1332 = vpop.permute.xlu0 %1331
          %1335 = vset.pattern.permute.xlu0 0
          %1336 = vperm.xlu0 %1335, %v1190
          %v1337 = vpop.permute.xlu0 %1336
          %1340 = vset.pattern.permute.xlu0 0
          %1341 = vperm.xlu0 %1340, %v1191
          %v1342 = vpop.permute.xlu0 %1341
          %1345 = vset.pattern.permute.xlu0 0
          %1346 = vperm.xlu0 %1345, %v1192
          %v1347 = vpop.permute.xlu0 %1346
          %1350 = vset.pattern.permute.xlu0 0
          %1351 = vperm.xlu0 %1350, %v1193
          %v1352 = vpop.permute.xlu0 %1351
          %v1354 = vmul.f32 %v1130, %v1197
          %v1355 = vmul.f32 %v1131, %v1202
          %v1356 = vmul.f32 %v1132, %v1207
          %v1357 = vmul.f32 %v1133, %v1212
          %v1358 = vmul.f32 %v1134, %v1217
          %v1359 = vmul.f32 %v1135, %v1222
          %v1360 = vmul.f32 %v1136, %v1227
          %v1361 = vmul.f32 %v1137, %v1232
          %v1362 = vmul.f32 %v1138, %v1237
          %v1363 = vmul.f32 %v1139, %v1242
          %v1364 = vmul.f32 %v1140, %v1247
          %v1365 = vmul.f32 %v1141, %v1252
          %v1366 = vmul.f32 %v1142, %v1257
          %v1367 = vmul.f32 %v1143, %v1262
          %v1368 = vmul.f32 %v1144, %v1267
          %v1369 = vmul.f32 %v1145, %v1272
          %v1370 = vmul.f32 %v1146, %v1277
          %v1371 = vmul.f32 %v1147, %v1282
          %v1372 = vmul.f32 %v1148, %v1287
          %v1373 = vmul.f32 %v1149, %v1292
          %v1374 = vmul.f32 %v1150, %v1297
          %v1375 = vmul.f32 %v1151, %v1302
          %v1376 = vmul.f32 %v1152, %v1307
          %v1377 = vmul.f32 %v1153, %v1312
          %v1378 = vmul.f32 %v1154, %v1317
          %v1379 = vmul.f32 %v1155, %v1322
          %v1380 = vmul.f32 %v1156, %v1327
          %v1381 = vmul.f32 %v1157, %v1332
          %v1382 = vmul.f32 %v1158, %v1337
          %v1383 = vmul.f32 %v1159, %v1342
          %v1384 = vmul.f32 %v1160, %v1347
          %v1385 = vmul.f32 %v1161, %v1352
          %v1386 = vpack.c.bf16 %v1355, %v1354
          %v1387 = vpack.c.bf16 %v1357, %v1356
          %v1388 = vpack.c.bf16 %v1359, %v1358
          %v1389 = vpack.c.bf16 %v1361, %v1360
          %v1390 = vpack.c.bf16 %v1363, %v1362
          %v1391 = vpack.c.bf16 %v1365, %v1364
          %v1392 = vpack.c.bf16 %v1367, %v1366
          %v1393 = vpack.c.bf16 %v1369, %v1368
          %v1394 = vpack.c.bf16 %v1371, %v1370
          %v1395 = vpack.c.bf16 %v1373, %v1372
          %v1396 = vpack.c.bf16 %v1375, %v1374
          %v1397 = vpack.c.bf16 %v1377, %v1376
          %v1398 = vpack.c.bf16 %v1379, %v1378
          %v1399 = vpack.c.bf16 %v1381, %v1380
          %v1400 = vpack.c.bf16 %v1383, %v1382
          %v1401 = vpack.c.bf16 %v1385, %v1384
          %v1402 = vld [vmem:[%s437] sm:$0xf]
          %v1403 = vld [vmem:[%s437 + $0x4] sm:$0xf]
          %v1404 = vld [vmem:[%s437 + $0x8] sm:$0xf]
          %v1405 = vld [vmem:[%s437 + $0xc] sm:$0xf]
          %v1406 = vld [vmem:[%s437 + $0x10] sm:$0xf]
          %v1407 = vld [vmem:[%s437 + $0x14] sm:$0xf]
          %v1408 = vld [vmem:[%s437 + $0x18] sm:$0xf]
          %v1409 = vld [vmem:[%s437 + $0x1c] sm:$0xf]
          %v1410 = vld [vmem:[%s437 + $0x20] sm:$0xf]
          %v1411 = vld [vmem:[%s437 + $0x24] sm:$0xf]
          %v1412 = vld [vmem:[%s437 + $0x28] sm:$0xf]
          %v1413 = vld [vmem:[%s437 + $0x2c] sm:$0xf]
          %v1414 = vld [vmem:[%s437 + $0x30] sm:$0xf]
          %v1415 = vld [vmem:[%s437 + $0x34] sm:$0xf]
          %v1416 = vld [vmem:[%s437 + $0x38] sm:$0xf]
          %v1417 = vld [vmem:[%s437 + $0x3c] sm:$0xf]
          %v1418 = vld [vmem:[%s442] sm:$0xf]
          %v1419 = vld [vmem:[%s442 + $0x4] sm:$0xf]
          %v1420 = vld [vmem:[%s442 + $0x8] sm:$0xf]
          %v1421 = vld [vmem:[%s442 + $0xc] sm:$0xf]
          %v1422 = vld [vmem:[%s442 + $0x10] sm:$0xf]
          %v1423 = vld [vmem:[%s442 + $0x14] sm:$0xf]
          %v1424 = vld [vmem:[%s442 + $0x18] sm:$0xf]
          %v1425 = vld [vmem:[%s442 + $0x1c] sm:$0xf]
          %v1426 = vld [vmem:[%s442 + $0x20] sm:$0xf]
          %v1427 = vld [vmem:[%s442 + $0x24] sm:$0xf]
          %v1428 = vld [vmem:[%s442 + $0x28] sm:$0xf]
          %v1429 = vld [vmem:[%s442 + $0x2c] sm:$0xf]
          %v1430 = vld [vmem:[%s442 + $0x30] sm:$0xf]
          %v1431 = vld [vmem:[%s442 + $0x34] sm:$0xf]
          %v1432 = vld [vmem:[%s442 + $0x38] sm:$0xf]
          %v1433 = vld [vmem:[%s442 + $0x3c] sm:$0xf]
          %v1450 = vunpack.c.l.b16 %v1418
          %v1451 = vunpack.c.l.b16 %v1419
          %v1452 = vunpack.c.l.b16 %v1420
          %v1453 = vunpack.c.l.b16 %v1421
          %v1454 = vunpack.c.l.b16 %v1422
          %v1455 = vunpack.c.l.b16 %v1423
          %v1456 = vunpack.c.l.b16 %v1424
          %v1457 = vunpack.c.l.b16 %v1425
          %v1458 = vunpack.c.l.b16 %v1426
          %v1459 = vunpack.c.l.b16 %v1427
          %v1460 = vunpack.c.l.b16 %v1428
          %v1461 = vunpack.c.l.b16 %v1429
          %v1462 = vunpack.c.l.b16 %v1430
          %v1463 = vunpack.c.l.b16 %v1431
          %v1464 = vunpack.c.l.b16 %v1432
          %v1465 = vunpack.c.l.b16 %v1433
          %v1466 = vpack.c.b16 %v1451, %v1450
          %v1467 = vpack.c.b16 %v1453, %v1452
          %v1468 = vpack.c.b16 %v1455, %v1454
          %v1469 = vpack.c.b16 %v1457, %v1456
          %v1470 = vpack.c.b16 %v1459, %v1458
          %v1471 = vpack.c.b16 %v1461, %v1460
          %v1472 = vpack.c.b16 %v1463, %v1462
          %v1473 = vpack.c.b16 %v1465, %v1464
          %1482 = vmatprep.subr.bf16.mxu0 0
          %1483 = vmatpush1.bf16.msra.mxu0 %v1466
          %1484 = vmatprep.subr.bf16.mxu0 0
          %1485 = vmatpush1.bf16.msra.mxu0 %v1467
          %1486 = vmatprep.subr.bf16.mxu0 0
          %1487 = vmatpush1.bf16.msra.mxu0 %v1468
          %1488 = vmatprep.subr.bf16.mxu0 0
          %1489 = vmatpush1.bf16.msra.mxu0 %v1469
          %1490 = vmatprep.subr.bf16.mxu0 0
          %1491 = vmatpush1.bf16.msra.mxu0 %v1470
          %1492 = vmatprep.subr.bf16.mxu0 0
          %1493 = vmatpush1.bf16.msra.mxu0 %v1471
          %1494 = vmatprep.subr.bf16.mxu0 0
          %1495 = vmatpush1.bf16.msra.mxu0 %v1472
          %1496 = vmatprep.subr.bf16.mxu0 0
          %1497 = vmatpush1.bf16.msra.mxu0 %v1473
          %1498 = vmatprep.subr.bf16.mxu0 0
          %1499 = vmatpush1.bf16.msra.mxu0 0
          %1500 = vmatprep.subr.bf16.mxu0 0
          %1501 = vmatpush1.bf16.msra.mxu0 0
          %1502 = vmatprep.subr.bf16.mxu0 0
          %1503 = vmatpush1.bf16.msra.mxu0 0
          %1504 = vmatprep.subr.bf16.mxu0 0
          %1505 = vmatpush1.bf16.msra.mxu0 0
          %1506 = vmatprep.subr.bf16.mxu0 0
          %1507 = vmatpush1.bf16.msra.mxu0 0
          %1508 = vmatprep.subr.bf16.mxu0 0
          %1509 = vmatpush1.bf16.msra.mxu0 0
          %1510 = vmatprep.subr.bf16.mxu0 0
          %1511 = vmatpush1.bf16.msra.mxu0 0
          %1512 = vmatprep.subr.bf16.mxu0 0
          %1513 = vmatpush1.bf16.msra.mxu0 0
          %1514 = vmatprep.mubr.bf16.mxu0 0
          %1515 = vmatmul.mubr.bf16.gmra.mrb[0].mxu0 %v1114
          %v1516 = vpop.f32.mrb[0].mxu0
          %v1517 = vadd.f32 0.0, %v1516
          %v1518 = vpop.f32.mrb[0].mxu0
          %v1519 = vpop.f32.mrb[0].mxu0
          %v1520 = vadd.f32 0.0, %v1519
          %v1521 = vpop.f32.mrb[0].mxu0
          %1522 = vmatprep.mubr.bf16.mxu0 0
          %1523 = vmatmul.mubr.bf16.gmra.mrb[0].mxu0 %v1115
          %v1524 = vpop.f32.mrb[0].mxu0
          %v1525 = vadd.f32 0.0, %v1524
          %v1526 = vpop.f32.mrb[0].mxu0
          %v1527 = vpop.f32.mrb[0].mxu0
          %v1528 = vadd.f32 0.0, %v1527
          %v1529 = vpop.f32.mrb[0].mxu0
          %1530 = vmatprep.mubr.bf16.mxu0 0
          %1531 = vmatmul.mubr.bf16.gmra.mrb[0].mxu0 %v1116
          %v1532 = vpop.f32.mrb[0].mxu0
          %v1533 = vadd.f32 0.0, %v1532
          %v1534 = vpop.f32.mrb[0].mxu0
          %v1535 = vpop.f32.mrb[0].mxu0
          %v1536 = vadd.f32 0.0, %v1535
          %v1537 = vpop.f32.mrb[0].mxu0
          %1538 = vmatprep.mubr.bf16.mxu0 0
          %1539 = vmatmul.mubr.bf16.gmra.mrb[0].mxu0 %v1117
          %v1540 = vpop.f32.mrb[0].mxu0
          %v1541 = vadd.f32 0.0, %v1540
          %v1542 = vpop.f32.mrb[0].mxu0
          %v1543 = vpop.f32.mrb[0].mxu0
          %v1544 = vadd.f32 0.0, %v1543
          %v1545 = vpop.f32.mrb[0].mxu0
          %1546 = vmatprep.mubr.bf16.mxu0 0
          %1547 = vmatmul.mubr.bf16.gmra.mrb[0].mxu0 %v1118
          %v1548 = vpop.f32.mrb[0].mxu0
          %v1549 = vadd.f32 0.0, %v1548
          %v1550 = vpop.f32.mrb[0].mxu0
          %v1551 = vpop.f32.mrb[0].mxu0
          %v1552 = vadd.f32 0.0, %v1551
          %v1553 = vpop.f32.mrb[0].mxu0
          %1554 = vmatprep.mubr.bf16.mxu0 0
          %1555 = vmatmul.mubr.bf16.gmra.mrb[0].mxu0 %v1119
          %v1556 = vpop.f32.mrb[0].mxu0
          %v1557 = vadd.f32 0.0, %v1556
          %v1558 = vpop.f32.mrb[0].mxu0
          %v1559 = vpop.f32.mrb[0].mxu0
          %v1560 = vadd.f32 0.0, %v1559
          %v1561 = vpop.f32.mrb[0].mxu0
          %1562 = vmatprep.mubr.bf16.mxu0 0
          %1563 = vmatmul.mubr.bf16.gmra.mrb[0].mxu0 %v1120
          %v1564 = vpop.f32.mrb[0].mxu0
          %v1565 = vadd.f32 0.0, %v1564
          %v1566 = vpop.f32.mrb[0].mxu0
          %v1567 = vpop.f32.mrb[0].mxu0
          %v1568 = vadd.f32 0.0, %v1567
          %v1569 = vpop.f32.mrb[0].mxu0
          %1570 = vmatprep.mubr.bf16.mxu0 0
          %1571 = vmatmul.mubr.bf16.gmra.mrb[0].mxu0 %v1121
          %v1572 = vpop.f32.mrb[0].mxu0
          %v1573 = vadd.f32 0.0, %v1572
          %v1574 = vpop.f32.mrb[0].mxu0
          %v1575 = vpop.f32.mrb[0].mxu0
          %v1576 = vadd.f32 0.0, %v1575
          %v1577 = vpop.f32.mrb[0].mxu0
          %1578 = vmatprep.mubr.bf16.mxu0 0
          %1579 = vmatmul.mubr.bf16.gmra.mrb[0].mxu0 %v1122
          %v1580 = vpop.f32.mrb[0].mxu0
          %v1581 = vadd.f32 0.0, %v1580
          %v1582 = vpop.f32.mrb[0].mxu0
          %v1583 = vpop.f32.mrb[0].mxu0
          %v1584 = vadd.f32 0.0, %v1583
          %v1585 = vpop.f32.mrb[0].mxu0
          %1586 = vmatprep.mubr.bf16.mxu0 0
          %1587 = vmatmul.mubr.bf16.gmra.mrb[0].mxu0 %v1123
          %v1588 = vpop.f32.mrb[0].mxu0
          %v1589 = vadd.f32 0.0, %v1588
          %v1590 = vpop.f32.mrb[0].mxu0
          %v1591 = vpop.f32.mrb[0].mxu0
          %v1592 = vadd.f32 0.0, %v1591
          %v1593 = vpop.f32.mrb[0].mxu0
          %1594 = vmatprep.mubr.bf16.mxu0 0
          %1595 = vmatmul.mubr.bf16.gmra.mrb[0].mxu0 %v1124
          %v1596 = vpop.f32.mrb[0].mxu0
          %v1597 = vadd.f32 0.0, %v1596
          %v1598 = vpop.f32.mrb[0].mxu0
          %v1599 = vpop.f32.mrb[0].mxu0
          %v1600 = vadd.f32 0.0, %v1599
          %v1601 = vpop.f32.mrb[0].mxu0
          %1602 = vmatprep.mubr.bf16.mxu0 0
          %1603 = vmatmul.mubr.bf16.gmra.mrb[0].mxu0 %v1125
          %v1604 = vpop.f32.mrb[0].mxu0
          %v1605 = vadd.f32 0.0, %v1604
          %v1606 = vpop.f32.mrb[0].mxu0
          %v1607 = vpop.f32.mrb[0].mxu0
          %v1608 = vadd.f32 0.0, %v1607
          %v1609 = vpop.f32.mrb[0].mxu0
          %1610 = vmatprep.mubr.bf16.mxu0 0
          %1611 = vmatmul.mubr.bf16.gmra.mrb[0].mxu0 %v1126
          %v1612 = vpop.f32.mrb[0].mxu0
          %v1613 = vadd.f32 0.0, %v1612
          %v1614 = vpop.f32.mrb[0].mxu0
          %v1615 = vpop.f32.mrb[0].mxu0
          %v1616 = vadd.f32 0.0, %v1615
          %v1617 = vpop.f32.mrb[0].mxu0
          %1618 = vmatprep.mubr.bf16.mxu0 0
          %1619 = vmatmul.mubr.bf16.gmra.mrb[0].mxu0 %v1127
          %v1620 = vpop.f32.mrb[0].mxu0
          %v1621 = vadd.f32 0.0, %v1620
          %v1622 = vpop.f32.mrb[0].mxu0
          %v1623 = vpop.f32.mrb[0].mxu0
          %v1624 = vadd.f32 0.0, %v1623
          %v1625 = vpop.f32.mrb[0].mxu0
          %1626 = vmatprep.mubr.bf16.mxu0 0
          %1627 = vmatmul.mubr.bf16.gmra.mrb[0].mxu0 %v1128
          %v1628 = vpop.f32.mrb[0].mxu0
          %v1629 = vadd.f32 0.0, %v1628
          %v1630 = vpop.f32.mrb[0].mxu0
          %v1631 = vpop.f32.mrb[0].mxu0
          %v1632 = vadd.f32 0.0, %v1631
          %v1633 = vpop.f32.mrb[0].mxu0
          %1634 = vmatprep.mubr.bf16.mxu0 0
          %1635 = vmatmul.mubr.bf16.gmra.mrb[0].mxu0 %v1129
          %v1636 = vpop.f32.mrb[0].mxu0
          %v1637 = vadd.f32 0.0, %v1636
          %v1638 = vpop.f32.mrb[0].mxu0
          %v1639 = vpop.f32.mrb[0].mxu0
          %v1640 = vadd.f32 0.0, %v1639
          %v1641 = vpop.f32.mrb[0].mxu0
          %1642 = vdwg.mxu0
          %v1659 = vunpack.c.l.b16 %v1402
          %v1660 = vunpack.c.l.b16 %v1403
          %v1661 = vunpack.c.l.b16 %v1404
          %v1662 = vunpack.c.l.b16 %v1405
          %v1663 = vunpack.c.l.b16 %v1406
          %v1664 = vunpack.c.l.b16 %v1407
          %v1665 = vunpack.c.l.b16 %v1408
          %v1666 = vunpack.c.l.b16 %v1409
          %v1667 = vunpack.c.l.b16 %v1410
          %v1668 = vunpack.c.l.b16 %v1411
          %v1669 = vunpack.c.l.b16 %v1412
          %v1670 = vunpack.c.l.b16 %v1413
          %v1671 = vunpack.c.l.b16 %v1414
          %v1672 = vunpack.c.l.b16 %v1415
          %v1673 = vunpack.c.l.b16 %v1416
          %v1674 = vunpack.c.l.b16 %v1417
          %v1675 = vpack.c.b16 %v1660, %v1659
          %v1676 = vpack.c.b16 %v1662, %v1661
          %v1677 = vpack.c.b16 %v1664, %v1663
          %v1678 = vpack.c.b16 %v1666, %v1665
          %v1679 = vpack.c.b16 %v1668, %v1667
          %v1680 = vpack.c.b16 %v1670, %v1669
          %v1681 = vpack.c.b16 %v1672, %v1671
          %v1682 = vpack.c.b16 %v1674, %v1673
          %1691 = vmatprep.subr.bf16.mxu0 0
          %1692 = vmatpush1.bf16.msra.mxu0 %v1675
          %1693 = vmatprep.subr.bf16.mxu0 0
          %1694 = vmatpush1.bf16.msra.mxu0 %v1676
          %1695 = vmatprep.subr.bf16.mxu0 0
          %1696 = vmatpush1.bf16.msra.mxu0 %v1677
          %1697 = vmatprep.subr.bf16.mxu0 0
          %1698 = vmatpush1.bf16.msra.mxu0 %v1678
          %1699 = vmatprep.subr.bf16.mxu0 0
          %1700 = vmatpush1.bf16.msra.mxu0 %v1679
          %1701 = vmatprep.subr.bf16.mxu0 0
          %1702 = vmatpush1.bf16.msra.mxu0 %v1680
          %1703 = vmatprep.subr.bf16.mxu0 0
          %1704 = vmatpush1.bf16.msra.mxu0 %v1681
          %1705 = vmatprep.subr.bf16.mxu0 0
          %1706 = vmatpush1.bf16.msra.mxu0 %v1682
          %1707 = vmatprep.subr.bf16.mxu0 0
          %1708 = vmatpush1.bf16.msra.mxu0 0
          %1709 = vmatprep.subr.bf16.mxu0 0
          %1710 = vmatpush1.bf16.msra.mxu0 0
          %1711 = vmatprep.subr.bf16.mxu0 0
          %1712 = vmatpush1.bf16.msra.mxu0 0
          %1713 = vmatprep.subr.bf16.mxu0 0
          %1714 = vmatpush1.bf16.msra.mxu0 0
          %1715 = vmatprep.subr.bf16.mxu0 0
          %1716 = vmatpush1.bf16.msra.mxu0 0
          %1717 = vmatprep.subr.bf16.mxu0 0
          %1718 = vmatpush1.bf16.msra.mxu0 0
          %1719 = vmatprep.subr.bf16.mxu0 0
          %1720 = vmatpush1.bf16.msra.mxu0 0
          %1721 = vmatprep.subr.bf16.mxu0 0
          %1722 = vmatpush1.bf16.msra.mxu0 0
          %1723 = vmatprep.mubr.bf16.mxu0 0
          %1724 = vmatmul.mubr.bf16.gmra.mrb[0].mxu0 %v1386
          %v1725 = vpop.f32.mrb[0].mxu0
          %v1726 = vadd.f32 %v1517, %v1725
          %v1727 = vpop.f32.mrb[0].mxu0
          %v1728 = vpop.f32.mrb[0].mxu0
          %v1729 = vadd.f32 %v1520, %v1728
          %v1730 = vpop.f32.mrb[0].mxu0
          %1731 = vmatprep.mubr.bf16.mxu0 0
          %1732 = vmatmul.mubr.bf16.gmra.mrb[0].mxu0 %v1387
          %v1733 = vpop.f32.mrb[0].mxu0
          %v1734 = vadd.f32 %v1525, %v1733
          %v1735 = vpop.f32.mrb[0].mxu0
          %v1736 = vpop.f32.mrb[0].mxu0
          %v1737 = vadd.f32 %v1528, %v1736
          %v1738 = vpop.f32.mrb[0].mxu0
          %1739 = vmatprep.mubr.bf16.mxu0 0
          %1740 = vmatmul.mubr.bf16.gmra.mrb[0].mxu0 %v1388
          %v1741 = vpop.f32.mrb[0].mxu0
          %v1742 = vadd.f32 %v1533, %v1741
          %v1743 = vpop.f32.mrb[0].mxu0
          %v1744 = vpop.f32.mrb[0].mxu0
          %v1745 = vadd.f32 %v1536, %v1744
          %v1746 = vpop.f32.mrb[0].mxu0
          %1747 = vmatprep.mubr.bf16.mxu0 0
          %1748 = vmatmul.mubr.bf16.gmra.mrb[0].mxu0 %v1389
          %v1749 = vpop.f32.mrb[0].mxu0
          %v1750 = vadd.f32 %v1541, %v1749
          %v1751 = vpop.f32.mrb[0].mxu0
          %v1752 = vpop.f32.mrb[0].mxu0
          %v1753 = vadd.f32 %v1544, %v1752
          %v1754 = vpop.f32.mrb[0].mxu0
          %1755 = vmatprep.mubr.bf16.mxu0 0
          %1756 = vmatmul.mubr.bf16.gmra.mrb[0].mxu0 %v1390
          %v1757 = vpop.f32.mrb[0].mxu0
          %v1758 = vadd.f32 %v1549, %v1757
          %v1759 = vpop.f32.mrb[0].mxu0
          %v1760 = vpop.f32.mrb[0].mxu0
          %v1761 = vadd.f32 %v1552, %v1760
          %v1762 = vpop.f32.mrb[0].mxu0
          %1763 = vmatprep.mubr.bf16.mxu0 0
          %1764 = vmatmul.mubr.bf16.gmra.mrb[0].mxu0 %v1391
          %v1765 = vpop.f32.mrb[0].mxu0
          %v1766 = vadd.f32 %v1557, %v1765
          %v1767 = vpop.f32.mrb[0].mxu0
          %v1768 = vpop.f32.mrb[0].mxu0
          %v1769 = vadd.f32 %v1560, %v1768
          %v1770 = vpop.f32.mrb[0].mxu0
          %1771 = vmatprep.mubr.bf16.mxu0 0
          %1772 = vmatmul.mubr.bf16.gmra.mrb[0].mxu0 %v1392
          %v1773 = vpop.f32.mrb[0].mxu0
          %v1774 = vadd.f32 %v1565, %v1773
          %v1775 = vpop.f32.mrb[0].mxu0
          %v1776 = vpop.f32.mrb[0].mxu0
          %v1777 = vadd.f32 %v1568, %v1776
          %v1778 = vpop.f32.mrb[0].mxu0
          %1779 = vmatprep.mubr.bf16.mxu0 0
          %1780 = vmatmul.mubr.bf16.gmra.mrb[0].mxu0 %v1393
          %v1781 = vpop.f32.mrb[0].mxu0
          %v1782 = vadd.f32 %v1573, %v1781
          %v1783 = vpop.f32.mrb[0].mxu0
          %v1784 = vpop.f32.mrb[0].mxu0
          %v1785 = vadd.f32 %v1576, %v1784
          %v1786 = vpop.f32.mrb[0].mxu0
          %1787 = vmatprep.mubr.bf16.mxu0 0
          %1788 = vmatmul.mubr.bf16.gmra.mrb[0].mxu0 %v1394
          %v1789 = vpop.f32.mrb[0].mxu0
          %v1790 = vadd.f32 %v1581, %v1789
          %v1791 = vpop.f32.mrb[0].mxu0
          %v1792 = vpop.f32.mrb[0].mxu0
          %v1793 = vadd.f32 %v1584, %v1792
          %v1794 = vpop.f32.mrb[0].mxu0
          %1795 = vmatprep.mubr.bf16.mxu0 0
          %1796 = vmatmul.mubr.bf16.gmra.mrb[0].mxu0 %v1395
          %v1797 = vpop.f32.mrb[0].mxu0
          %v1798 = vadd.f32 %v1589, %v1797
          %v1799 = vpop.f32.mrb[0].mxu0
          %v1800 = vpop.f32.mrb[0].mxu0
          %v1801 = vadd.f32 %v1592, %v1800
          %v1802 = vpop.f32.mrb[0].mxu0
          %1803 = vmatprep.mubr.bf16.mxu0 0
          %1804 = vmatmul.mubr.bf16.gmra.mrb[0].mxu0 %v1396
          %v1805 = vpop.f32.mrb[0].mxu0
          %v1806 = vadd.f32 %v1597, %v1805
          %v1807 = vpop.f32.mrb[0].mxu0
          %v1808 = vpop.f32.mrb[0].mxu0
          %v1809 = vadd.f32 %v1600, %v1808
          %v1810 = vpop.f32.mrb[0].mxu0
          %1811 = vmatprep.mubr.bf16.mxu0 0
          %1812 = vmatmul.mubr.bf16.gmra.mrb[0].mxu0 %v1397
          %v1813 = vpop.f32.mrb[0].mxu0
          %v1814 = vadd.f32 %v1605, %v1813
          %v1815 = vpop.f32.mrb[0].mxu0
          %v1816 = vpop.f32.mrb[0].mxu0
          %v1817 = vadd.f32 %v1608, %v1816
          %v1818 = vpop.f32.mrb[0].mxu0
          %1819 = vmatprep.mubr.bf16.mxu0 0
          %1820 = vmatmul.mubr.bf16.gmra.mrb[0].mxu0 %v1398
          %v1821 = vpop.f32.mrb[0].mxu0
          %v1822 = vadd.f32 %v1613, %v1821
          %v1823 = vpop.f32.mrb[0].mxu0
          %v1824 = vpop.f32.mrb[0].mxu0
          %v1825 = vadd.f32 %v1616, %v1824
          %v1826 = vpop.f32.mrb[0].mxu0
          %1827 = vmatprep.mubr.bf16.mxu0 0
          %1828 = vmatmul.mubr.bf16.gmra.mrb[0].mxu0 %v1399
          %v1829 = vpop.f32.mrb[0].mxu0
          %v1830 = vadd.f32 %v1621, %v1829
          %v1831 = vpop.f32.mrb[0].mxu0
          %v1832 = vpop.f32.mrb[0].mxu0
          %v1833 = vadd.f32 %v1624, %v1832
          %v1834 = vpop.f32.mrb[0].mxu0
          %1835 = vmatprep.mubr.bf16.mxu0 0
          %1836 = vmatmul.mubr.bf16.gmra.mrb[0].mxu0 %v1400
          %v1837 = vpop.f32.mrb[0].mxu0
          %v1838 = vadd.f32 %v1629, %v1837
          %v1839 = vpop.f32.mrb[0].mxu0
          %v1840 = vpop.f32.mrb[0].mxu0
          %v1841 = vadd.f32 %v1632, %v1840
          %v1842 = vpop.f32.mrb[0].mxu0
          %1843 = vmatprep.mubr.bf16.mxu0 0
          %1844 = vmatmul.mubr.bf16.gmra.mrb[0].mxu0 %v1401
          %v1845 = vpop.f32.mrb[0].mxu0
          %v1846 = vadd.f32 %v1637, %v1845
          %v1847 = vpop.f32.mrb[0].mxu0
          %v1848 = vpop.f32.mrb[0].mxu0
          %v1849 = vadd.f32 %v1640, %v1848
          %v1850 = vpop.f32.mrb[0].mxu0
          %1851 = vdwg.mxu0
          %v1852 = vld [vmem:[%s445] sm:$0x1]
          %v1854 = vlaneseq
          %v1855 = vshrl.u32 %v1854, 7
          %v1856 = vsub.s32 0, %v1855
          %v1857 = vrot.slane %v1852, %v1856
          %v1859 = vadd.f32 %v1726, %v1857
          %v1860 = vadd.f32 %v1729, %v1857
          %v1861 = vadd.f32 %v1734, %v1857
          %v1862 = vadd.f32 %v1737, %v1857
          %v1863 = vadd.f32 %v1742, %v1857
          %v1864 = vadd.f32 %v1745, %v1857
          %v1865 = vadd.f32 %v1750, %v1857
          %v1866 = vadd.f32 %v1753, %v1857
          %v1867 = vadd.f32 %v1758, %v1857
          %v1868 = vadd.f32 %v1761, %v1857
          %v1869 = vadd.f32 %v1766, %v1857
          %v1870 = vadd.f32 %v1769, %v1857
          %v1871 = vadd.f32 %v1774, %v1857
          %v1872 = vadd.f32 %v1777, %v1857
          %v1873 = vadd.f32 %v1782, %v1857
          %v1874 = vadd.f32 %v1785, %v1857
          %v1875 = vadd.f32 %v1790, %v1857
          %v1876 = vadd.f32 %v1793, %v1857
          %v1877 = vadd.f32 %v1798, %v1857
          %v1878 = vadd.f32 %v1801, %v1857
          %v1879 = vadd.f32 %v1806, %v1857
          %v1880 = vadd.f32 %v1809, %v1857
          %v1881 = vadd.f32 %v1814, %v1857
          %v1882 = vadd.f32 %v1817, %v1857
          %v1883 = vadd.f32 %v1822, %v1857
          %v1884 = vadd.f32 %v1825, %v1857
          %v1885 = vadd.f32 %v1830, %v1857
          %v1886 = vadd.f32 %v1833, %v1857
          %v1887 = vadd.f32 %v1838, %v1857
          %v1888 = vadd.f32 %v1841, %v1857
          %v1889 = vadd.f32 %v1846, %v1857
          %v1890 = vadd.f32 %v1849, %v1857
          %v1891 = vmax.f32 %v1859, 0.0
          %v1892 = vmax.f32 %v1860, 0.0
          %v1893 = vmax.f32 %v1861, 0.0
          %v1894 = vmax.f32 %v1862, 0.0
          %v1895 = vmax.f32 %v1863, 0.0
          %v1896 = vmax.f32 %v1864, 0.0
          %v1897 = vmax.f32 %v1865, 0.0
          %v1898 = vmax.f32 %v1866, 0.0
          %v1899 = vmax.f32 %v1867, 0.0
          %v1900 = vmax.f32 %v1868, 0.0
          %v1901 = vmax.f32 %v1869, 0.0
          %v1902 = vmax.f32 %v1870, 0.0
          %v1903 = vmax.f32 %v1871, 0.0
          %v1904 = vmax.f32 %v1872, 0.0
          %v1905 = vmax.f32 %v1873, 0.0
          %v1906 = vmax.f32 %v1874, 0.0
          %v1907 = vmax.f32 %v1875, 0.0
          %v1908 = vmax.f32 %v1876, 0.0
          %v1909 = vmax.f32 %v1877, 0.0
          %v1910 = vmax.f32 %v1878, 0.0
          %v1911 = vmax.f32 %v1879, 0.0
          %v1912 = vmax.f32 %v1880, 0.0
          %v1913 = vmax.f32 %v1881, 0.0
          %v1914 = vmax.f32 %v1882, 0.0
          %v1915 = vmax.f32 %v1883, 0.0
          %v1916 = vmax.f32 %v1884, 0.0
          %v1917 = vmax.f32 %v1885, 0.0
          %v1918 = vmax.f32 %v1886, 0.0
          %v1919 = vmax.f32 %v1887, 0.0
          %v1920 = vmax.f32 %v1888, 0.0
          %v1921 = vmax.f32 %v1889, 0.0
          %v1922 = vmax.f32 %v1890, 0.0
          %v1923 = vpack.c.bf16 %v1892, %v1891
          %v1924 = vpack.c.bf16 %v1894, %v1893
          %v1925 = vpack.c.bf16 %v1896, %v1895
          %v1926 = vpack.c.bf16 %v1898, %v1897
          %v1927 = vpack.c.bf16 %v1900, %v1899
          %v1928 = vpack.c.bf16 %v1902, %v1901
          %v1929 = vpack.c.bf16 %v1904, %v1903
          %v1930 = vpack.c.bf16 %v1906, %v1905
          %v1931 = vpack.c.bf16 %v1908, %v1907
          %v1932 = vpack.c.bf16 %v1910, %v1909
          %v1933 = vpack.c.bf16 %v1912, %v1911
          %v1934 = vpack.c.bf16 %v1914, %v1913
          %v1935 = vpack.c.bf16 %v1916, %v1915
          %v1936 = vpack.c.bf16 %v1918, %v1917
          %v1937 = vpack.c.bf16 %v1920, %v1919
          %v1938 = vpack.c.bf16 %v1922, %v1921
          %s1939 = sadd.s32 %s479, %s1108
          %s1940 = sshra.s32 %s1939, 4
          %s1941 = sand.u32 %s1939, 15
          %s1942 = smul.addr %s1940, 8
          %s1943 = scalar_lea.vmem [#allocation3], %s1942
          %1944 = vst [vmem:[%s1943] sm:$0xff] %v1923
          %1945 = vst [vmem:[%s1943 + $0x8] sm:$0xff] %v1924
          %1946 = vst [vmem:[%s1943 + $0x10] sm:$0xff] %v1925
          %1947 = vst [vmem:[%s1943 + $0x18] sm:$0xff] %v1926
          %1948 = vst [vmem:[%s1943 + $0x20] sm:$0xff] %v1927
          %1949 = vst [vmem:[%s1943 + $0x28] sm:$0xff] %v1928
          %1950 = vst [vmem:[%s1943 + $0x30] sm:$0xff] %v1929
          %1951 = vst [vmem:[%s1943 + $0x38] sm:$0xff] %v1930
          %1952 = vst [vmem:[%s1943 + $0x40] sm:$0xff] %v1931
          %1953 = vst [vmem:[%s1943 + $0x48] sm:$0xff] %v1932
          %1954 = vst [vmem:[%s1943 + $0x50] sm:$0xff] %v1933
          %1955 = vst [vmem:[%s1943 + $0x58] sm:$0xff] %v1934
          %1956 = vst [vmem:[%s1943 + $0x60] sm:$0xff] %v1935
          %1957 = vst [vmem:[%s1943 + $0x68] sm:$0xff] %v1936
          %1958 = vst [vmem:[%s1943 + $0x70] sm:$0xff] %v1937
          %1959 = vst [vmem:[%s1943 + $0x78] sm:$0xff] %v1938
          %p1960 = scmp.eq.s32.totalorder %s30, 1
          // Predicated region
          $region107: #{graph_sage_forward.1} parent=105 // pred_check
            %p1961 = pneg %p1960
          $region108: #{graph_sage_forward.1} parent=105 // pred_check_branch
            %1963 = sbr.rel (%p1961) target = $region110
          $region109: #{graph_sage_forward.1} parent=105 // pred_region
            // Predicated region
            $region111: #{graph_sage_forward.1} parent=109 // pred_check
              %p1964 = pneg %p481
            $region112: #{graph_sage_forward.1} parent=109 // pred_check_branch
              %1966 = sbr.rel (%p1964) target = $region114
            $region113: #{graph_sage_forward.1} parent=109 // pred_region
              %1967 = vst [vmem:[#allocation4] sm:$0xff] 0.0
            $region114: #{graph_sage_forward.1} parent=109 // pred_fallthru
              _
            %v1968 = vld [vmem:[#allocation4] sm:$0xff]
            %v1969 = vld [vmem:[%s450] sm:$0xff]
            %v1971 = vunpack.c.l.b16 %v1969
            %v1972 = vunpack.c.h.b16 %v1969
            %v1973 = vpack.c.b16 %v1971, %v1971
            %v1974 = vpack.c.b16 %v1972, %v1972
            %1977 = vmatprep.subr.bf16.mxu0 0
            %1978 = vmatpush1.bf16.msra.mxu0 %v1923
            %1979 = vmatprep.subr.bf16.mxu0 0
            %1980 = vmatpush1.bf16.msra.mxu0 %v1924
            %1981 = vmatprep.subr.bf16.mxu0 0
            %1982 = vmatpush1.bf16.msra.mxu0 %v1925
            %1983 = vmatprep.subr.bf16.mxu0 0
            %1984 = vmatpush1.bf16.msra.mxu0 %v1926
            %1985 = vmatprep.subr.bf16.mxu0 0
            %1986 = vmatpush1.bf16.msra.mxu0 %v1927
            %1987 = vmatprep.subr.bf16.mxu0 0
            %1988 = vmatpush1.bf16.msra.mxu0 %v1928
            %1989 = vmatprep.subr.bf16.mxu0 0
            %1990 = vmatpush1.bf16.msra.mxu0 %v1929
            %1991 = vmatprep.subr.bf16.mxu0 0
            %1992 = vmatpush1.bf16.msra.mxu0 %v1930
            %1993 = vmatprep.subr.bf16.mxu0 0
            %1994 = vmatpush1.bf16.msra.mxu0 %v1931
            %1995 = vmatprep.subr.bf16.mxu0 0
            %1996 = vmatpush1.bf16.msra.mxu0 %v1932
            %1997 = vmatprep.subr.bf16.mxu0 0
            %1998 = vmatpush1.bf16.msra.mxu0 %v1933
            %1999 = vmatprep.subr.bf16.mxu0 0
            %2000 = vmatpush1.bf16.msra.mxu0 %v1934
            %2001 = vmatprep.subr.bf16.mxu0 0
            %2002 = vmatpush1.bf16.msra.mxu0 %v1935
            %2003 = vmatprep.subr.bf16.mxu0 0
            %2004 = vmatpush1.bf16.msra.mxu0 %v1936
            %2005 = vmatprep.subr.bf16.mxu0 0
            %2006 = vmatpush1.bf16.msra.mxu0 %v1937
            %2007 = vmatprep.subr.bf16.mxu0 0
            %2008 = vmatpush1.bf16.msra.mxu0 %v1938
            %2009 = vmatprep.mubr.bf16.mxu0 %v1974
            %2010 = vmatmul.mubr.bf16.gmra.mrb[0].mxu0 %v1973
            %v2011 = vpop.f32.mrb[0].mxu0
            %v2012 = vadd.f32 0.0, %v2011
            %v2013 = vpop.f32.mrb[0].mxu0
            %v2014 = vpop.f32.mrb[0].mxu0
            %v2015 = vpop.f32.mrb[0].mxu0
            %2016 = vdwg.mxu0
            %v2017 = vadd.f32 %v1968, %v2012
            %2018 = vst [vmem:[#allocation4] sm:$0xff] %v2017
            %p2019 = scmp.eq.s32.totalorder %s31, 1
            // Predicated region
            $region115: #{graph_sage_forward.1} parent=109 // pred_check
              %p2020 = pneg %p2019
            $region116: #{graph_sage_forward.1} parent=109 // pred_check_branch
              %2022 = sbr.rel (%p2020) target = $region118
            $region117: #{graph_sage_forward.1} parent=109 // pred_region
              %v2023 = vld [vmem:[#allocation4] sm:$0xff]
              %v2024 = vld [vmem:[#allocation9] sm:$0xff]
              %v2025 = vld [vmem:[#allocation9 + $0x8] sm:$0xff]
              %v2026 = vld [vmem:[#allocation9 + $0x10] sm:$0xff]
              %v2027 = vld [vmem:[#allocation9 + $0x18] sm:$0xff]
              %v2028 = vld [vmem:[#allocation9 + $0x20] sm:$0xff]
              %v2029 = vld [vmem:[#allocation9 + $0x28] sm:$0xff]
              %v2030 = vld [vmem:[#allocation9 + $0x30] sm:$0xff]
              %v2031 = vld [vmem:[#allocation9 + $0x38] sm:$0xff]
              %v2032 = vld [vmem:[#allocation9 + $0x40] sm:$0xff]
              %v2033 = vld [vmem:[#allocation9 + $0x48] sm:$0xff]
              %v2034 = vld [vmem:[#allocation9 + $0x50] sm:$0xff]
              %v2035 = vld [vmem:[#allocation9 + $0x58] sm:$0xff]
              %v2036 = vld [vmem:[#allocation9 + $0x60] sm:$0xff]
              %v2037 = vld [vmem:[#allocation9 + $0x68] sm:$0xff]
              %v2038 = vld [vmem:[#allocation9 + $0x70] sm:$0xff]
              %v2039 = vld [vmem:[#allocation9 + $0x78] sm:$0xff]
              %v2040 = vld [vmem:[%s8] sm:$0x1]
              %v2042 = vlaneseq
              %v2043 = vshrl.u32 %v2042, 7
              %v2044 = vsub.s32 0, %v2043
              %v2045 = vrot.slane %v2040, %v2044
              %2047 = vmatprep.subr.mxu0 0.0
              %2048 = vmatpush1.msra.mxu0 %v2024
              %2049 = vmatprep.subr.mxu0 0.0
              %2050 = vmatpush1.msra.mxu0 %v2025
              %2051 = vmatprep.subr.mxu0 0.0
              %2052 = vmatpush1.msra.mxu0 %v2026
              %2053 = vmatprep.subr.mxu0 0.0
              %2054 = vmatpush1.msra.mxu0 %v2027
              %2055 = vmatprep.subr.mxu0 0.0
              %2056 = vmatpush1.msra.mxu0 %v2028
              %2057 = vmatprep.subr.mxu0 0.0
              %2058 = vmatpush1.msra.mxu0 %v2029
              %2059 = vmatprep.subr.mxu0 0.0
              %2060 = vmatpush1.msra.mxu0 %v2030
              %2061 = vmatprep.subr.mxu0 0.0
              %2062 = vmatpush1.msra.mxu0 %v2031
              %2063 = vmatprep.subr.mxu0 0.0
              %2064 = vmatpush1.msra.mxu0 %v2032
              %2065 = vmatprep.subr.mxu0 0.0
              %2066 = vmatpush1.msra.mxu0 %v2033
              %2067 = vmatprep.subr.mxu0 0.0
              %2068 = vmatpush1.msra.mxu0 %v2034
              %2069 = vmatprep.subr.mxu0 0.0
              %2070 = vmatpush1.msra.mxu0 %v2035
              %2071 = vmatprep.subr.mxu0 0.0
              %2072 = vmatpush1.msra.mxu0 %v2036
              %2073 = vmatprep.subr.mxu0 0.0
              %2074 = vmatpush1.msra.mxu0 %v2037
              %2075 = vmatprep.subr.mxu0 0.0
              %2076 = vmatpush1.msra.mxu0 %v2038
              %2077 = vmatprep.subr.mxu0 0.0
              %2078 = vmatpush1.msra.mxu0 %v2039
              %2079 = vmatprep.subr.mxu0 0.0
              %2080 = vmatpush1.msra.mxu0 0.0
              %2081 = vmatprep.subr.mxu0 0.0
              %2082 = vmatpush1.msra.mxu0 0.0
              %2083 = vmatprep.subr.mxu0 0.0
              %2084 = vmatpush1.msra.mxu0 0.0
              %2085 = vmatprep.subr.mxu0 0.0
              %2086 = vmatpush1.msra.mxu0 0.0
              %2087 = vmatprep.subr.mxu0 0.0
              %2088 = vmatpush1.msra.mxu0 0.0
              %2089 = vmatprep.subr.mxu0 0.0
              %2090 = vmatpush1.msra.mxu0 0.0
              %2091 = vmatprep.subr.mxu0 0.0
              %2092 = vmatpush1.msra.mxu0 0.0
              %2093 = vmatprep.subr.mxu0 0.0
              %2094 = vmatpush1.msra.mxu0 0.0
              %2095 = vmatprep.subr.mxu0 0.0
              %2096 = vmatpush1.msra.mxu0 0.0
              %2097 = vmatprep.subr.mxu0 0.0
              %2098 = vmatpush1.msra.mxu0 0.0
              %2099 = vmatprep.subr.mxu0 0.0
              %2100 = vmatpush1.msra.mxu0 0.0
              %2101 = vmatprep.subr.mxu0 0.0
              %2102 = vmatpush1.msra.mxu0 0.0
              %2103 = vmatprep.subr.mxu0 0.0
              %2104 = vmatpush1.msra.mxu0 0.0
              %2105 = vmatprep.subr.mxu0 0.0
              %2106 = vmatpush1.msra.mxu0 0.0
              %2107 = vmatprep.subr.mxu0 0.0
              %2108 = vmatpush1.msra.mxu0 0.0
              %2109 = vmatprep.subr.mxu0 0.0
              %2110 = vmatpush1.msra.mxu0 0.0
              %2111 = vmatprep.mubr.f32.mxu0 0.0
              %2112 = vmatmul.mubr.f32.gmra.mrb[0].mxu0 %v2023
              %v2113 = vpop.f32.mrb[0].mxu0
              %v2114 = vadd.f32 %v2045, %v2113
              %v2115 = vpop.f32.mrb[0].mxu0
              %2116 = vdwg.mxu0
              %2117 = vst [vmem:[#allocation11] sm:$0xff] %v2114
            $region118: #{graph_sage_forward.1} parent=109 // pred_fallthru
              _
          $region110: #{graph_sage_forward.1} parent=105 // pred_fallthru
            _
        $region106: #{graph_sage_forward.1} parent=51 // pred_fallthru
          _
        // Predicated region
        $region119: #{graph_sage_forward.1} parent=51 // pred_check
          %p2118 = pneg %p257
        $region120: #{graph_sage_forward.1} parent=51 // pred_check_branch
          %2120 = sbr.rel (%p2118) target = $region122
        $region121: #{graph_sage_forward.1} parent=51 // pred_region
          %s2122 = ssub.s32 128, 128
          %2123 = vsyncadd [#allocation8], %s2122
          %s2125 = sshll.u32 [#allocation11], 4
          %s2126 = int_to_ptr.vmem [resolvable:$true] %s2125
          %2128 = dma.vmem_to_hbm [thread:$0]  %s2126, 128, %s9, [#allocation8]
        $region122: #{graph_sage_forward.1} parent=51 // pred_fallthru
          _
        // Predicated region
        $region123: #{graph_sage_forward.1} parent=51 // pred_check
          %p2129 = pneg %p257
        $region124: #{graph_sage_forward.1} parent=51 // pred_check_branch
          %2131 = sbr.rel (%p2129) target = $region126
        $region125: #{graph_sage_forward.1} parent=51 // pred_region
          %2132 = dma.done [#allocation8], 128
        $region126: #{graph_sage_forward.1} parent=51 // pred_fallthru
          _
      $region52: #{graph_sage_forward.1} parent=5 // pred_fallthru
        _
      %p2133 = scmp.le.s32.totalorder 2, %s20
      // Predicated region
      $region127: #{graph_sage_forward.1} parent=5 // pred_check
        %p2134 = pneg %p2133
      $region128: #{graph_sage_forward.1} parent=5 // pred_check_branch
        %2136 = sbr.rel (%p2134) target = $region130
      $region129: #{graph_sage_forward.1} parent=5 // pred_region
        %s2137 = ssub.s32 %s20, 2
      $region130: #{graph_sage_forward.1} parent=5 // pred_fallthru
        _
    $region6: #{graph_sage_forward.1} parent=1 // loop_footer
      %s24 = sadd.s32 1, %s20
    $region7: #{graph_sage_forward.1} parent=1 // loop_footer_branch
      %19 = sbr.rel target = $region3
    $region8: #{graph_sage_forward.1} parent=1 // loop_exit
      _
    %2138 = vsyncpa [#allocation7], 1
    %s2139 = scalar_lea.sflag [#allocation7], 1
    %2140 = vsyncpa %s2139, 1
    %2141 = vsyncpa [#allocation10], 1
    %2142 = vsyncpa [#allocation8], 1
    %s2143 = scalar_lea.sflag [#allocation8], 1
    %2144 = vsyncpa %s2143, 1
  %2145 = vsyncmov [#allocation5]
  %s2146 = vpop.sfrf %2145
  %p2147 = scmp.eq.s32.totalorder %s2146, 0
  %p2148 = pneg %p2147
  %2150 = shalt.err (%p2148)

</llo_original>
